<compile_context>
chip_gen: v7x
topology: tpu7x:2x2x1
jax: 0.10.0
libtpu: 0.0.40
codegen_flags: <defaults>
</compile_context>

<pallas_src>
import functools

import jax
import jax.numpy as jnp
from jax.experimental import pallas as pl
from jax.experimental.pallas import tpu as pltpu


def _lstm_fc_relu_kernel(x_ref, wih_ref, whh_ref, b_ref, wfc_ref, bfc_ref,
                         y_ref, xw_ref, hh_ref, *, seq_len, batch_p, hidden):
    T, Bp, H = seq_len, batch_p, hidden

    # Hoisted input projection for ALL timesteps (+ combined LSTM bias): one MXU call.
    xw_ref[...] = (
        jnp.dot(x_ref[...], wih_ref[...], preferred_element_type=jnp.float32)
        + b_ref[...])

    whh = whh_ref[...]                        # (H, 4H) — loaded once, reused every step

    def step(t, carry):
        h, c = carry
        row = pl.multiple_of(t * Bp, 8)       # Bp is a multiple of 8 -> aligned slices
        gates = (xw_ref[pl.ds(row, Bp), :]
                 + jnp.dot(h, whh, preferred_element_type=jnp.float32))
        # PyTorch gate order: i, f, g, o
        i_g = jax.nn.sigmoid(gates[:, 0 * H:1 * H])
        f_g = jax.nn.sigmoid(gates[:, 1 * H:2 * H])
        g_g = jnp.tanh(gates[:, 2 * H:3 * H])
        o_g = jax.nn.sigmoid(gates[:, 3 * H:4 * H])
        c_new = f_g * c + i_g * g_g
        h_new = o_g * jnp.tanh(c_new)
        hh_ref[pl.ds(row, Bp), :] = h_new     # stash h_t for the batched FC below
        return h_new, c_new

    h0 = jnp.zeros((Bp, H), jnp.float32)
    c0 = jnp.zeros((Bp, H), jnp.float32)
    jax.lax.fori_loop(0, T, step, (h0, c0), unroll=True)

    # Fused FC + ReLU over all timesteps: one matmul, one lane-dense store.
    out = (jnp.dot(hh_ref[...], wfc_ref[...], preferred_element_type=jnp.float32)
           + bfc_ref[...])
    y_ref[...] = jnp.maximum(out, 0.0).astype(y_ref.dtype)


def lstm_model_forward(x, params):
    """x: (T, B, I) float32. Returns (T, B, O) float32."""
    T, B, I = x.shape
    H = params["w_hh"].shape[0]          # w_hh stored transposed: (H, 4H)
    O = params["w_fc"].shape[1]          # w_fc stored transposed: (H, O)

    Bp = ((B + 7) // 8) * 8              # sublane-dense batch
    Op = ((O + 127) // 128) * 128        # lane-dense FC output (sliced back below)

    x_p = jnp.pad(x, ((0, 0), (0, Bp - B), (0, 0))).reshape(T * Bp, I)
    wfc_p = jnp.pad(params["w_fc"], ((0, 0), (0, Op - O)))
    bfc_p = jnp.pad(params["b_fc"], ((0, 0), (0, Op - O)))

    kernel = functools.partial(_lstm_fc_relu_kernel,
                               seq_len=T, batch_p=Bp, hidden=H)

    vmem = pl.BlockSpec(memory_space=pltpu.MemorySpace.VMEM)
    # Total VMEM footprint here is well under the default scoped limit on
    # v5e/v6e/v7x; for large H, switch weights to bf16 and set
    # pltpu.CompilerParams(vmem_limit_bytes=...) explicitly.
    y_p = pl.pallas_call(
        kernel,
        out_shape=jax.ShapeDtypeStruct((T * Bp, Op), jnp.float32),
        in_specs=[vmem] * 6,
        out_specs=vmem,
        scratch_shapes=[
            pltpu.VMEM((T * Bp, 4 * H), jnp.float32),   # x @ W_ih^T + b (all timesteps)
            pltpu.VMEM((T * Bp, H), jnp.float32),       # h_t history
        ],
    )(x_p, params["w_ih"], params["w_hh"], params["b"], wfc_p, bfc_p)

    return y_p.reshape(T, Bp, Op)[:, :B, :O]


def init_params(key, input_size, hidden_size, output_size):
    """Deterministic params, shapes matching nn.LSTM / nn.Linear (single layer,
    unidirectional). Stored pre-transposed for right-multiplication."""
    ks = jax.random.split(key, 6)
    s = 1.0 / jnp.sqrt(hidden_size)
    # PyTorch: weight_ih_l0 (4H, I), weight_hh_l0 (4H, H), bias_ih/hh (4H,)
    w_ih = jax.random.uniform(ks[0], (4 * hidden_size, input_size), jnp.float32, -s, s)
    w_hh = jax.random.uniform(ks[1], (4 * hidden_size, hidden_size), jnp.float32, -s, s)
    b_ih = jax.random.uniform(ks[2], (4 * hidden_size,), jnp.float32, -s, s)
    b_hh = jax.random.uniform(ks[3], (4 * hidden_size,), jnp.float32, -s, s)
    # nn.Linear: weight (O, H), bias (O,)
    w_fc = jax.random.uniform(ks[4], (output_size, hidden_size), jnp.float32, -s, s)
    b_fc = jax.random.uniform(ks[5], (output_size,), jnp.float32, -s, s)
    return {
        "w_ih": w_ih.T,                                   # (I, 4H)
        "w_hh": w_hh.T,                                   # (H, 4H)
        "b": (b_ih + b_hh).reshape(1, 4 * hidden_size),   # (1, 4H)
        "w_fc": w_fc.T,                                   # (H, O)
        "b_fc": b_fc.reshape(1, output_size),             # (1, O)
    }


def reference_forward(x, params):
    """Pure-JAX reference (lax.scan) for correctness check."""
    H = params["w_hh"].shape[0]
    B = x.shape[1]

    def step(carry, x_t):
        h, c = carry
        gates = (x_t @ params["w_ih"] + params["b"]) + h @ params["w_hh"]
        i = jax.nn.sigmoid(gates[:, 0 * H:1 * H])
        f = jax.nn.sigmoid(gates[:, 1 * H:2 * H])
        g = jnp.tanh(gates[:, 2 * H:3 * H])
        o = jax.nn.sigmoid(gates[:, 3 * H:4 * H])
        c = f * c + i * g
        h = o * jnp.tanh(c)
        y = jnp.maximum(h @ params["w_fc"] + params["b_fc"], 0.0)
        return (h, c), y

    init = (jnp.zeros((B, H), jnp.float32), jnp.zeros((B, H), jnp.float32))
    _, ys = jax.lax.scan(step, init, x)
    return ys


if __name__ == "__main__":
    seq_len, batch, input_size, hidden_size, output_size = 8, 4, 16, 32, 8

    key = jax.random.PRNGKey(0)
    k_x, k_p = jax.random.split(key)
    x = jax.random.normal(k_x, (seq_len, batch, input_size), jnp.float32)
    params = init_params(k_p, input_size, hidden_size, output_size)

    y = jax.block_until_ready(lstm_model_forward(x, params))
    y_ref = reference_forward(x, params)

    assert y.shape == (seq_len, batch, output_size)
    max_err = float(jnp.max(jnp.abs(y - y_ref)))
    # Tolerance covers TPU matmul-precision differences between the Pallas
    # (MXU, f32-accumulate) path and XLA's default-precision reference dots.
    assert jnp.allclose(y, y_ref, atol=2e-3, rtol=2e-3), f"max abs err {max_err}"

    print("KERNEL_OK")
</pallas_src>

<mosaic_0001>
module attributes {stable_mosaic.version = 11 : i64} {
  func.func @_lstm_fc_relu_kernel(%arg0: memref<64x16xf32, #tpu.memory_space<vmem>>, %arg1: memref<16x128xf32, #tpu.memory_space<vmem>>, %arg2: memref<32x128xf32, #tpu.memory_space<vmem>>, %arg3: memref<1x128xf32, #tpu.memory_space<vmem>>, %arg4: memref<32x128xf32, #tpu.memory_space<vmem>>, %arg5: memref<1x128xf32, #tpu.memory_space<vmem>>, %arg6: memref<64x128xf32, #tpu.memory_space<vmem>>, %arg7: memref<64x128xf32, #tpu.memory_space<vmem>>, %arg8: memref<64x32xf32, #tpu.memory_space<vmem>>) attributes {dimension_semantics = [], scalar_prefetch = 0 : i64, scratch_operands = 2 : i64, tpu.core_type = #tpu.core_type<tc>} {
    %c0 = arith.constant 0 : index
    %c0_0 = arith.constant 0 : index
    %0 = vector.load %arg0[%c0, %c0_0] : memref<64x16xf32, #tpu.memory_space<vmem>>, vector<64x16xf32>
    %c0_1 = arith.constant 0 : index
    %c0_2 = arith.constant 0 : index
    %1 = vector.load %arg1[%c0_1, %c0_2] : memref<16x128xf32, #tpu.memory_space<vmem>>, vector<16x128xf32>
    %cst = arith.constant dense<0.000000e+00> : vector<64x128xf32>
    %2 = tpu.matmul %0, %1, %cst {dimension_numbers = #tpu.dot_dimension_numbers<[1], [0], [0], [1], [0, 0, 1, 1], [], []>} : vector<64x16xf32>, vector<16x128xf32>, vector<64x128xf32> -> vector<64x128xf32>
    %c0_3 = arith.constant 0 : index
    %c0_4 = arith.constant 0 : index
    %3 = vector.load %arg3[%c0_3, %c0_4] : memref<1x128xf32, #tpu.memory_space<vmem>>, vector<1x128xf32>
    %4 = vector.broadcast %3 : vector<1x128xf32> to vector<64x128xf32>
    %5 = arith.addf %2, %4 : vector<64x128xf32>
    %c0_5 = arith.constant 0 : index
    %c0_6 = arith.constant 0 : index
    %6 = vector.load %arg7[%c0_5, %c0_6] : memref<64x128xf32, #tpu.memory_space<vmem>>, vector<64x128xf32>
    tpu.vector_store %arg7[%c0_5, %c0_6], %5 {strides = array<i32>} : memref<64x128xf32, #tpu.memory_space<vmem>>, vector<64x128xf32>,
    %c0_7 = arith.constant 0 : index
    %c0_8 = arith.constant 0 : index
    %7 = vector.load %arg2[%c0_7, %c0_8] : memref<32x128xf32, #tpu.memory_space<vmem>>, vector<32x128xf32>
    %cst_9 = arith.constant 0.000000e+00 : f32
    %8 = vector.broadcast %cst_9 : f32 to vector<8x32xf32>
    %cst_10 = arith.constant 0.000000e+00 : f32
    %9 = vector.broadcast %cst_10 : f32 to vector<8x32xf32>
    %c0_i32 = arith.constant 0 : i32
    %c8_i32 = arith.constant 8 : i32
    %10 = arith.muli %c0_i32, %c8_i32 : i32
    %11 = tpu.assume_multiple %10, 8 : i32
    %12 = arith.index_cast %11 : i32 to index
    %c0_11 = arith.constant 0 : index
    %13 = vector.load %arg7[%12, %c0_11] : memref<64x128xf32, #tpu.memory_space<vmem>>, vector<8x128xf32>
    %cst_12 = arith.constant dense<0.000000e+00> : vector<8x128xf32>
    %14 = tpu.matmul %8, %7, %cst_12 {dimension_numbers = #tpu.dot_dimension_numbers<[1], [0], [0], [1], [0, 0, 1, 1], [], []>} : vector<8x32xf32>, vector<32x128xf32>, vector<8x128xf32> -> vector<8x128xf32>
    %15 = arith.addf %13, %14 : vector<8x128xf32>
    %16 = vector.extract_strided_slice %15 {offsets = [0, 0], sizes = [8, 32], strides = [1, 1]} : vector<8x128xf32> to vector<8x32xf32>
    %17 = arith.negf %16 : vector<8x32xf32>
    %18 = math.exp %17 : vector<8x32xf32>
    %cst_13 = arith.constant 1.000000e+00 : f32
    %19 = vector.broadcast %cst_13 : f32 to vector<8x32xf32>
    %20 = arith.addf %19, %18 : vector<8x32xf32>
    %21 = arith.divf %19, %20 : vector<8x32xf32>
    %22 = vector.extract_strided_slice %15 {offsets = [0, 32], sizes = [8, 32], strides = [1, 1]} : vector<8x128xf32> to vector<8x32xf32>
    %23 = arith.negf %22 : vector<8x32xf32>
    %24 = math.exp %23 : vector<8x32xf32>
    %cst_14 = arith.constant 1.000000e+00 : f32
    %25 = vector.broadcast %cst_14 : f32 to vector<8x32xf32>
    %26 = arith.addf %25, %24 : vector<8x32xf32>
    %27 = arith.divf %25, %26 : vector<8x32xf32>
    %28 = vector.extract_strided_slice %15 {offsets = [0, 64], sizes = [8, 32], strides = [1, 1]} : vector<8x128xf32> to vector<8x32xf32>
    %29 = math.tanh %28 : vector<8x32xf32>
    %30 = vector.extract_strided_slice %15 {offsets = [0, 96], sizes = [8, 32], strides = [1, 1]} : vector<8x128xf32> to vector<8x32xf32>
    %31 = arith.negf %30 : vector<8x32xf32>
    %32 = math.exp %31 : vector<8x32xf32>
    %cst_15 = arith.constant 1.000000e+00 : f32
    %33 = vector.broadcast %cst_15 : f32 to vector<8x32xf32>
    %34 = arith.addf %33, %32 : vector<8x32xf32>
    %35 = arith.divf %33, %34 : vector<8x32xf32>
    %36 = arith.mulf %27, %9 : vector<8x32xf32>
    %37 = arith.mulf %21, %29 : vector<8x32xf32>
    %38 = arith.addf %36, %37 : vector<8x32xf32>
    %39 = math.tanh %38 : vector<8x32xf32>
    %40 = arith.mulf %35, %39 : vector<8x32xf32>
    %41 = arith.index_cast %11 : i32 to index
    %c0_16 = arith.constant 0 : index
    %42 = vector.load %arg8[%41, %c0_16] : memref<64x32xf32, #tpu.memory_space<vmem>>, vector<8x32xf32>
    tpu.vector_store %arg8[%41, %c0_16], %40 {strides = array<i32>} : memref<64x32xf32, #tpu.memory_space<vmem>>, vector<8x32xf32>,
    %c1_i32 = arith.constant 1 : i32
    %c8_i32_17 = arith.constant 8 : i32
    %43 = arith.muli %c1_i32, %c8_i32_17 : i32
    %44 = tpu.assume_multiple %43, 8 : i32
    %45 = arith.index_cast %44 : i32 to index
    %c0_18 = arith.constant 0 : index
    %46 = vector.load %arg7[%45, %c0_18] : memref<64x128xf32, #tpu.memory_space<vmem>>, vector<8x128xf32>
    %cst_19 = arith.constant dense<0.000000e+00> : vector<8x128xf32>
    %47 = tpu.matmul %40, %7, %cst_19 {dimension_numbers = #tpu.dot_dimension_numbers<[1], [0], [0], [1], [0, 0, 1, 1], [], []>} : vector<8x32xf32>, vector<32x128xf32>, vector<8x128xf32> -> vector<8x128xf32>
    %48 = arith.addf %46, %47 : vector<8x128xf32>
    %49 = vector.extract_strided_slice %48 {offsets = [0, 0], sizes = [8, 32], strides = [1, 1]} : vector<8x128xf32> to vector<8x32xf32>
    %50 = arith.negf %49 : vector<8x32xf32>
    %51 = math.exp %50 : vector<8x32xf32>
    %cst_20 = arith.constant 1.000000e+00 : f32
    %52 = vector.broadcast %cst_20 : f32 to vector<8x32xf32>
    %53 = arith.addf %52, %51 : vector<8x32xf32>
    %54 = arith.divf %52, %53 : vector<8x32xf32>
    %55 = vector.extract_strided_slice %48 {offsets = [0, 32], sizes = [8, 32], strides = [1, 1]} : vector<8x128xf32> to vector<8x32xf32>
    %56 = arith.negf %55 : vector<8x32xf32>
    %57 = math.exp %56 : vector<8x32xf32>
    %cst_21 = arith.constant 1.000000e+00 : f32
    %58 = vector.broadcast %cst_21 : f32 to vector<8x32xf32>
    %59 = arith.addf %58, %57 : vector<8x32xf32>
    %60 = arith.divf %58, %59 : vector<8x32xf32>
    %61 = vector.extract_strided_slice %48 {offsets = [0, 64], sizes = [8, 32], strides = [1, 1]} : vector<8x128xf32> to vector<8x32xf32>
    %62 = math.tanh %61 : vector<8x32xf32>
    %63 = vector.extract_strided_slice %48 {offsets = [0, 96], sizes = [8, 32], strides = [1, 1]} : vector<8x128xf32> to vector<8x32xf32>
    %64 = arith.negf %63 : vector<8x32xf32>
    %65 = math.exp %64 : vector<8x32xf32>
    %cst_22 = arith.constant 1.000000e+00 : f32
    %66 = vector.broadcast %cst_22 : f32 to vector<8x32xf32>
    %67 = arith.addf %66, %65 : vector<8x32xf32>
    %68 = arith.divf %66, %67 : vector<8x32xf32>
    %69 = arith.mulf %60, %38 : vector<8x32xf32>
    %70 = arith.mulf %54, %62 : vector<8x32xf32>
    %71 = arith.addf %69, %70 : vector<8x32xf32>
    %72 = math.tanh %71 : vector<8x32xf32>
    %73 = arith.mulf %68, %72 : vector<8x32xf32>
    %74 = arith.index_cast %44 : i32 to index
    %c0_23 = arith.constant 0 : index
    %75 = vector.load %arg8[%74, %c0_23] : memref<64x32xf32, #tpu.memory_space<vmem>>, vector<8x32xf32>
    tpu.vector_store %arg8[%74, %c0_23], %73 {strides = array<i32>} : memref<64x32xf32, #tpu.memory_space<vmem>>, vector<8x32xf32>,
    %c2_i32 = arith.constant 2 : i32
    %c8_i32_24 = arith.constant 8 : i32
    %76 = arith.muli %c2_i32, %c8_i32_24 : i32
    %77 = tpu.assume_multiple %76, 8 : i32
    %78 = arith.index_cast %77 : i32 to index
    %c0_25 = arith.constant 0 : index
    %79 = vector.load %arg7[%78, %c0_25] : memref<64x128xf32, #tpu.memory_space<vmem>>, vector<8x128xf32>
    %cst_26 = arith.constant dense<0.000000e+00> : vector<8x128xf32>
    %80 = tpu.matmul %73, %7, %cst_26 {dimension_numbers = #tpu.dot_dimension_numbers<[1], [0], [0], [1], [0, 0, 1, 1], [], []>} : vector<8x32xf32>, vector<32x128xf32>, vector<8x128xf32> -> vector<8x128xf32>
    %81 = arith.addf %79, %80 : vector<8x128xf32>
    %82 = vector.extract_strided_slice %81 {offsets = [0, 0], sizes = [8, 32], strides = [1, 1]} : vector<8x128xf32> to vector<8x32xf32>
    %83 = arith.negf %82 : vector<8x32xf32>
    %84 = math.exp %83 : vector<8x32xf32>
    %cst_27 = arith.constant 1.000000e+00 : f32
    %85 = vector.broadcast %cst_27 : f32 to vector<8x32xf32>
    %86 = arith.addf %85, %84 : vector<8x32xf32>
    %87 = arith.divf %85, %86 : vector<8x32xf32>
    %88 = vector.extract_strided_slice %81 {offsets = [0, 32], sizes = [8, 32], strides = [1, 1]} : vector<8x128xf32> to vector<8x32xf32>
    %89 = arith.negf %88 : vector<8x32xf32>
    %90 = math.exp %89 : vector<8x32xf32>
    %cst_28 = arith.constant 1.000000e+00 : f32
    %91 = vector.broadcast %cst_28 : f32 to vector<8x32xf32>
    %92 = arith.addf %91, %90 : vector<8x32xf32>
    %93 = arith.divf %91, %92 : vector<8x32xf32>
    %94 = vector.extract_strided_slice %81 {offsets = [0, 64], sizes = [8, 32], strides = [1, 1]} : vector<8x128xf32> to vector<8x32xf32>
    %95 = math.tanh %94 : vector<8x32xf32>
    %96 = vector.extract_strided_slice %81 {offsets = [0, 96], sizes = [8, 32], strides = [1, 1]} : vector<8x128xf32> to vector<8x32xf32>
    %97 = arith.negf %96 : vector<8x32xf32>
    %98 = math.exp %97 : vector<8x32xf32>
    %cst_29 = arith.constant 1.000000e+00 : f32
    %99 = vector.broadcast %cst_29 : f32 to vector<8x32xf32>
    %100 = arith.addf %99, %98 : vector<8x32xf32>
    %101 = arith.divf %99, %100 : vector<8x32xf32>
    %102 = arith.mulf %93, %71 : vector<8x32xf32>
    %103 = arith.mulf %87, %95 : vector<8x32xf32>
    %104 = arith.addf %102, %103 : vector<8x32xf32>
    %105 = math.tanh %104 : vector<8x32xf32>
    %106 = arith.mulf %101, %105 : vector<8x32xf32>
    %107 = arith.index_cast %77 : i32 to index
    %c0_30 = arith.constant 0 : index
    %108 = vector.load %arg8[%107, %c0_30] : memref<64x32xf32, #tpu.memory_space<vmem>>, vector<8x32xf32>
    tpu.vector_store %arg8[%107, %c0_30], %106 {strides = array<i32>} : memref<64x32xf32, #tpu.memory_space<vmem>>, vector<8x32xf32>,
    %c3_i32 = arith.constant 3 : i32
    %c8_i32_31 = arith.constant 8 : i32
    %109 = arith.muli %c3_i32, %c8_i32_31 : i32
    %110 = tpu.assume_multiple %109, 8 : i32
    %111 = arith.index_cast %110 : i32 to index
    %c0_32 = arith.constant 0 : index
    %112 = vector.load %arg7[%111, %c0_32] : memref<64x128xf32, #tpu.memory_space<vmem>>, vector<8x128xf32>
    %cst_33 = arith.constant dense<0.000000e+00> : vector<8x128xf32>
    %113 = tpu.matmul %106, %7, %cst_33 {dimension_numbers = #tpu.dot_dimension_numbers<[1], [0], [0], [1], [0, 0, 1, 1], [], []>} : vector<8x32xf32>, vector<32x128xf32>, vector<8x128xf32> -> vector<8x128xf32>
    %114 = arith.addf %112, %113 : vector<8x128xf32>
    %115 = vector.extract_strided_slice %114 {offsets = [0, 0], sizes = [8, 32], strides = [1, 1]} : vector<8x128xf32> to vector<8x32xf32>
    %116 = arith.negf %115 : vector<8x32xf32>
    %117 = math.exp %116 : vector<8x32xf32>
    %cst_34 = arith.constant 1.000000e+00 : f32
    %118 = vector.broadcast %cst_34 : f32 to vector<8x32xf32>
    %119 = arith.addf %118, %117 : vector<8x32xf32>
    %120 = arith.divf %118, %119 : vector<8x32xf32>
    %121 = vector.extract_strided_slice %114 {offsets = [0, 32], sizes = [8, 32], strides = [1, 1]} : vector<8x128xf32> to vector<8x32xf32>
    %122 = arith.negf %121 : vector<8x32xf32>
    %123 = math.exp %122 : vector<8x32xf32>
    %cst_35 = arith.constant 1.000000e+00 : f32
    %124 = vector.broadcast %cst_35 : f32 to vector<8x32xf32>
    %125 = arith.addf %124, %123 : vector<8x32xf32>
    %126 = arith.divf %124, %125 : vector<8x32xf32>
    %127 = vector.extract_strided_slice %114 {offsets = [0, 64], sizes = [8, 32], strides = [1, 1]} : vector<8x128xf32> to vector<8x32xf32>
    %128 = math.tanh %127 : vector<8x32xf32>
    %129 = vector.extract_strided_slice %114 {offsets = [0, 96], sizes = [8, 32], strides = [1, 1]} : vector<8x128xf32> to vector<8x32xf32>
    %130 = arith.negf %129 : vector<8x32xf32>
    %131 = math.exp %130 : vector<8x32xf32>
    %cst_36 = arith.constant 1.000000e+00 : f32
    %132 = vector.broadcast %cst_36 : f32 to vector<8x32xf32>
    %133 = arith.addf %132, %131 : vector<8x32xf32>
    %134 = arith.divf %132, %133 : vector<8x32xf32>
    %135 = arith.mulf %126, %104 : vector<8x32xf32>
    %136 = arith.mulf %120, %128 : vector<8x32xf32>
    %137 = arith.addf %135, %136 : vector<8x32xf32>
    %138 = math.tanh %137 : vector<8x32xf32>
    %139 = arith.mulf %134, %138 : vector<8x32xf32>
    %140 = arith.index_cast %110 : i32 to index
    %c0_37 = arith.constant 0 : index
    %141 = vector.load %arg8[%140, %c0_37] : memref<64x32xf32, #tpu.memory_space<vmem>>, vector<8x32xf32>
    tpu.vector_store %arg8[%140, %c0_37], %139 {strides = array<i32>} : memref<64x32xf32, #tpu.memory_space<vmem>>, vector<8x32xf32>,
    %c4_i32 = arith.constant 4 : i32
    %c8_i32_38 = arith.constant 8 : i32
    %142 = arith.muli %c4_i32, %c8_i32_38 : i32
    %143 = tpu.assume_multiple %142, 8 : i32
    %144 = arith.index_cast %143 : i32 to index
    %c0_39 = arith.constant 0 : index
    %145 = vector.load %arg7[%144, %c0_39] : memref<64x128xf32, #tpu.memory_space<vmem>>, vector<8x128xf32>
    %cst_40 = arith.constant dense<0.000000e+00> : vector<8x128xf32>
    %146 = tpu.matmul %139, %7, %cst_40 {dimension_numbers = #tpu.dot_dimension_numbers<[1], [0], [0], [1], [0, 0, 1, 1], [], []>} : vector<8x32xf32>, vector<32x128xf32>, vector<8x128xf32> -> vector<8x128xf32>
    %147 = arith.addf %145, %146 : vector<8x128xf32>
    %148 = vector.extract_strided_slice %147 {offsets = [0, 0], sizes = [8, 32], strides = [1, 1]} : vector<8x128xf32> to vector<8x32xf32>
    %149 = arith.negf %148 : vector<8x32xf32>
    %150 = math.exp %149 : vector<8x32xf32>
    %cst_41 = arith.constant 1.000000e+00 : f32
    %151 = vector.broadcast %cst_41 : f32 to vector<8x32xf32>
    %152 = arith.addf %151, %150 : vector<8x32xf32>
    %153 = arith.divf %151, %152 : vector<8x32xf32>
    %154 = vector.extract_strided_slice %147 {offsets = [0, 32], sizes = [8, 32], strides = [1, 1]} : vector<8x128xf32> to vector<8x32xf32>
    %155 = arith.negf %154 : vector<8x32xf32>
    %156 = math.exp %155 : vector<8x32xf32>
    %cst_42 = arith.constant 1.000000e+00 : f32
    %157 = vector.broadcast %cst_42 : f32 to vector<8x32xf32>
    %158 = arith.addf %157, %156 : vector<8x32xf32>
    %159 = arith.divf %157, %158 : vector<8x32xf32>
    %160 = vector.extract_strided_slice %147 {offsets = [0, 64], sizes = [8, 32], strides = [1, 1]} : vector<8x128xf32> to vector<8x32xf32>
    %161 = math.tanh %160 : vector<8x32xf32>
    %162 = vector.extract_strided_slice %147 {offsets = [0, 96], sizes = [8, 32], strides = [1, 1]} : vector<8x128xf32> to vector<8x32xf32>
    %163 = arith.negf %162 : vector<8x32xf32>
    %164 = math.exp %163 : vector<8x32xf32>
    %cst_43 = arith.constant 1.000000e+00 : f32
    %165 = vector.broadcast %cst_43 : f32 to vector<8x32xf32>
    %166 = arith.addf %165, %164 : vector<8x32xf32>
    %167 = arith.divf %165, %166 : vector<8x32xf32>
    %168 = arith.mulf %159, %137 : vector<8x32xf32>
    %169 = arith.mulf %153, %161 : vector<8x32xf32>
    %170 = arith.addf %168, %169 : vector<8x32xf32>
    %171 = math.tanh %170 : vector<8x32xf32>
    %172 = arith.mulf %167, %171 : vector<8x32xf32>
    %173 = arith.index_cast %143 : i32 to index
    %c0_44 = arith.constant 0 : index
    %174 = vector.load %arg8[%173, %c0_44] : memref<64x32xf32, #tpu.memory_space<vmem>>, vector<8x32xf32>
    tpu.vector_store %arg8[%173, %c0_44], %172 {strides = array<i32>} : memref<64x32xf32, #tpu.memory_space<vmem>>, vector<8x32xf32>,
    %c5_i32 = arith.constant 5 : i32
    %c8_i32_45 = arith.constant 8 : i32
    %175 = arith.muli %c5_i32, %c8_i32_45 : i32
    %176 = tpu.assume_multiple %175, 8 : i32
    %177 = arith.index_cast %176 : i32 to index
    %c0_46 = arith.constant 0 : index
    %178 = vector.load %arg7[%177, %c0_46] : memref<64x128xf32, #tpu.memory_space<vmem>>, vector<8x128xf32>
    %cst_47 = arith.constant dense<0.000000e+00> : vector<8x128xf32>
    %179 = tpu.matmul %172, %7, %cst_47 {dimension_numbers = #tpu.dot_dimension_numbers<[1], [0], [0], [1], [0, 0, 1, 1], [], []>} : vector<8x32xf32>, vector<32x128xf32>, vector<8x128xf32> -> vector<8x128xf32>
    %180 = arith.addf %178, %179 : vector<8x128xf32>
    %181 = vector.extract_strided_slice %180 {offsets = [0, 0], sizes = [8, 32], strides = [1, 1]} : vector<8x128xf32> to vector<8x32xf32>
    %182 = arith.negf %181 : vector<8x32xf32>
    %183 = math.exp %182 : vector<8x32xf32>
    %cst_48 = arith.constant 1.000000e+00 : f32
    %184 = vector.broadcast %cst_48 : f32 to vector<8x32xf32>
    %185 = arith.addf %184, %183 : vector<8x32xf32>
    %186 = arith.divf %184, %185 : vector<8x32xf32>
    %187 = vector.extract_strided_slice %180 {offsets = [0, 32], sizes = [8, 32], strides = [1, 1]} : vector<8x128xf32> to vector<8x32xf32>
    %188 = arith.negf %187 : vector<8x32xf32>
    %189 = math.exp %188 : vector<8x32xf32>
    %cst_49 = arith.constant 1.000000e+00 : f32
    %190 = vector.broadcast %cst_49 : f32 to vector<8x32xf32>
    %191 = arith.addf %190, %189 : vector<8x32xf32>
    %192 = arith.divf %190, %191 : vector<8x32xf32>
    %193 = vector.extract_strided_slice %180 {offsets = [0, 64], sizes = [8, 32], strides = [1, 1]} : vector<8x128xf32> to vector<8x32xf32>
    %194 = math.tanh %193 : vector<8x32xf32>
    %195 = vector.extract_strided_slice %180 {offsets = [0, 96], sizes = [8, 32], strides = [1, 1]} : vector<8x128xf32> to vector<8x32xf32>
    %196 = arith.negf %195 : vector<8x32xf32>
    %197 = math.exp %196 : vector<8x32xf32>
    %cst_50 = arith.constant 1.000000e+00 : f32
    %198 = vector.broadcast %cst_50 : f32 to vector<8x32xf32>
    %199 = arith.addf %198, %197 : vector<8x32xf32>
    %200 = arith.divf %198, %199 : vector<8x32xf32>
    %201 = arith.mulf %192, %170 : vector<8x32xf32>
    %202 = arith.mulf %186, %194 : vector<8x32xf32>
    %203 = arith.addf %201, %202 : vector<8x32xf32>
    %204 = math.tanh %203 : vector<8x32xf32>
    %205 = arith.mulf %200, %204 : vector<8x32xf32>
    %206 = arith.index_cast %176 : i32 to index
    %c0_51 = arith.constant 0 : index
    %207 = vector.load %arg8[%206, %c0_51] : memref<64x32xf32, #tpu.memory_space<vmem>>, vector<8x32xf32>
    tpu.vector_store %arg8[%206, %c0_51], %205 {strides = array<i32>} : memref<64x32xf32, #tpu.memory_space<vmem>>, vector<8x32xf32>,
    %c6_i32 = arith.constant 6 : i32
    %c8_i32_52 = arith.constant 8 : i32
    %208 = arith.muli %c6_i32, %c8_i32_52 : i32
    %209 = tpu.assume_multiple %208, 8 : i32
    %210 = arith.index_cast %209 : i32 to index
    %c0_53 = arith.constant 0 : index
    %211 = vector.load %arg7[%210, %c0_53] : memref<64x128xf32, #tpu.memory_space<vmem>>, vector<8x128xf32>
    %cst_54 = arith.constant dense<0.000000e+00> : vector<8x128xf32>
    %212 = tpu.matmul %205, %7, %cst_54 {dimension_numbers = #tpu.dot_dimension_numbers<[1], [0], [0], [1], [0, 0, 1, 1], [], []>} : vector<8x32xf32>, vector<32x128xf32>, vector<8x128xf32> -> vector<8x128xf32>
    %213 = arith.addf %211, %212 : vector<8x128xf32>
    %214 = vector.extract_strided_slice %213 {offsets = [0, 0], sizes = [8, 32], strides = [1, 1]} : vector<8x128xf32> to vector<8x32xf32>
    %215 = arith.negf %214 : vector<8x32xf32>
    %216 = math.exp %215 : vector<8x32xf32>
    %cst_55 = arith.constant 1.000000e+00 : f32
    %217 = vector.broadcast %cst_55 : f32 to vector<8x32xf32>
    %218 = arith.addf %217, %216 : vector<8x32xf32>
    %219 = arith.divf %217, %218 : vector<8x32xf32>
    %220 = vector.extract_strided_slice %213 {offsets = [0, 32], sizes = [8, 32], strides = [1, 1]} : vector<8x128xf32> to vector<8x32xf32>
    %221 = arith.negf %220 : vector<8x32xf32>
    %222 = math.exp %221 : vector<8x32xf32>
    %cst_56 = arith.constant 1.000000e+00 : f32
    %223 = vector.broadcast %cst_56 : f32 to vector<8x32xf32>
    %224 = arith.addf %223, %222 : vector<8x32xf32>
    %225 = arith.divf %223, %224 : vector<8x32xf32>
    %226 = vector.extract_strided_slice %213 {offsets = [0, 64], sizes = [8, 32], strides = [1, 1]} : vector<8x128xf32> to vector<8x32xf32>
    %227 = math.tanh %226 : vector<8x32xf32>
    %228 = vector.extract_strided_slice %213 {offsets = [0, 96], sizes = [8, 32], strides = [1, 1]} : vector<8x128xf32> to vector<8x32xf32>
    %229 = arith.negf %228 : vector<8x32xf32>
    %230 = math.exp %229 : vector<8x32xf32>
    %cst_57 = arith.constant 1.000000e+00 : f32
    %231 = vector.broadcast %cst_57 : f32 to vector<8x32xf32>
    %232 = arith.addf %231, %230 : vector<8x32xf32>
    %233 = arith.divf %231, %232 : vector<8x32xf32>
    %234 = arith.mulf %225, %203 : vector<8x32xf32>
    %235 = arith.mulf %219, %227 : vector<8x32xf32>
    %236 = arith.addf %234, %235 : vector<8x32xf32>
    %237 = math.tanh %236 : vector<8x32xf32>
    %238 = arith.mulf %233, %237 : vector<8x32xf32>
    %239 = arith.index_cast %209 : i32 to index
    %c0_58 = arith.constant 0 : index
    %240 = vector.load %arg8[%239, %c0_58] : memref<64x32xf32, #tpu.memory_space<vmem>>, vector<8x32xf32>
    tpu.vector_store %arg8[%239, %c0_58], %238 {strides = array<i32>} : memref<64x32xf32, #tpu.memory_space<vmem>>, vector<8x32xf32>,
    %c7_i32 = arith.constant 7 : i32
    %c8_i32_59 = arith.constant 8 : i32
    %241 = arith.muli %c7_i32, %c8_i32_59 : i32
    %242 = tpu.assume_multiple %241, 8 : i32
    %243 = arith.index_cast %242 : i32 to index
    %c0_60 = arith.constant 0 : index
    %244 = vector.load %arg7[%243, %c0_60] : memref<64x128xf32, #tpu.memory_space<vmem>>, vector<8x128xf32>
    %cst_61 = arith.constant dense<0.000000e+00> : vector<8x128xf32>
    %245 = tpu.matmul %238, %7, %cst_61 {dimension_numbers = #tpu.dot_dimension_numbers<[1], [0], [0], [1], [0, 0, 1, 1], [], []>} : vector<8x32xf32>, vector<32x128xf32>, vector<8x128xf32> -> vector<8x128xf32>
    %246 = arith.addf %244, %245 : vector<8x128xf32>
    %247 = vector.extract_strided_slice %246 {offsets = [0, 0], sizes = [8, 32], strides = [1, 1]} : vector<8x128xf32> to vector<8x32xf32>
    %248 = arith.negf %247 : vector<8x32xf32>
    %249 = math.exp %248 : vector<8x32xf32>
    %cst_62 = arith.constant 1.000000e+00 : f32
    %250 = vector.broadcast %cst_62 : f32 to vector<8x32xf32>
    %251 = arith.addf %250, %249 : vector<8x32xf32>
    %252 = arith.divf %250, %251 : vector<8x32xf32>
    %253 = vector.extract_strided_slice %246 {offsets = [0, 32], sizes = [8, 32], strides = [1, 1]} : vector<8x128xf32> to vector<8x32xf32>
    %254 = arith.negf %253 : vector<8x32xf32>
    %255 = math.exp %254 : vector<8x32xf32>
    %cst_63 = arith.constant 1.000000e+00 : f32
    %256 = vector.broadcast %cst_63 : f32 to vector<8x32xf32>
    %257 = arith.addf %256, %255 : vector<8x32xf32>
    %258 = arith.divf %256, %257 : vector<8x32xf32>
    %259 = vector.extract_strided_slice %246 {offsets = [0, 64], sizes = [8, 32], strides = [1, 1]} : vector<8x128xf32> to vector<8x32xf32>
    %260 = math.tanh %259 : vector<8x32xf32>
    %261 = vector.extract_strided_slice %246 {offsets = [0, 96], sizes = [8, 32], strides = [1, 1]} : vector<8x128xf32> to vector<8x32xf32>
    %262 = arith.negf %261 : vector<8x32xf32>
    %263 = math.exp %262 : vector<8x32xf32>
    %cst_64 = arith.constant 1.000000e+00 : f32
    %264 = vector.broadcast %cst_64 : f32 to vector<8x32xf32>
    %265 = arith.addf %264, %263 : vector<8x32xf32>
    %266 = arith.divf %264, %265 : vector<8x32xf32>
    %267 = arith.mulf %258, %236 : vector<8x32xf32>
    %268 = arith.mulf %252, %260 : vector<8x32xf32>
    %269 = arith.addf %267, %268 : vector<8x32xf32>
    %270 = math.tanh %269 : vector<8x32xf32>
    %271 = arith.mulf %266, %270 : vector<8x32xf32>
    %272 = arith.index_cast %242 : i32 to index
    %c0_65 = arith.constant 0 : index
    %273 = vector.load %arg8[%272, %c0_65] : memref<64x32xf32, #tpu.memory_space<vmem>>, vector<8x32xf32>
    tpu.vector_store %arg8[%272, %c0_65], %271 {strides = array<i32>} : memref<64x32xf32, #tpu.memory_space<vmem>>, vector<8x32xf32>,
    %c8_i32_66 = arith.constant 8 : i32
    %c0_67 = arith.constant 0 : index
    %c0_68 = arith.constant 0 : index
    %274 = vector.load %arg8[%c0_67, %c0_68] : memref<64x32xf32, #tpu.memory_space<vmem>>, vector<64x32xf32>
    %c0_69 = arith.constant 0 : index
    %c0_70 = arith.constant 0 : index
    %275 = vector.load %arg4[%c0_69, %c0_70] : memref<32x128xf32, #tpu.memory_space<vmem>>, vector<32x128xf32>
    %cst_71 = arith.constant dense<0.000000e+00> : vector<64x128xf32>
    %276 = tpu.matmul %274, %275, %cst_71 {dimension_numbers = #tpu.dot_dimension_numbers<[1], [0], [0], [1], [0, 0, 1, 1], [], []>} : vector<64x32xf32>, vector<32x128xf32>, vector<64x128xf32> -> vector<64x128xf32>
    %c0_72 = arith.constant 0 : index
    %c0_73 = arith.constant 0 : index
    %277 = vector.load %arg5[%c0_72, %c0_73] : memref<1x128xf32, #tpu.memory_space<vmem>>, vector<1x128xf32>
    %278 = vector.broadcast %277 : vector<1x128xf32> to vector<64x128xf32>
    %279 = arith.addf %276, %278 : vector<64x128xf32>
    %cst_74 = arith.constant 0.000000e+00 : f32
    %280 = vector.broadcast %cst_74 : f32 to vector<64x128xf32>
    %281 = arith.maximumf %279, %280 : vector<64x128xf32>
    %c0_75 = arith.constant 0 : index
    %c0_76 = arith.constant 0 : index
    %282 = vector.load %arg6[%c0_75, %c0_76] : memref<64x128xf32, #tpu.memory_space<vmem>>, vector<64x128xf32>
    tpu.vector_store %arg6[%c0_75, %c0_76], %281 {strides = array<i32>} : memref<64x128xf32, #tpu.memory_space<vmem>>, vector<64x128xf32>,
    return
  }
}

</mosaic_0001>

<llo_original>
// kernel: tpu_custom_call.1
$region0: #{tpu_custom_call.1}
  #allocation0 [shape = 'u32[]', space=smem, size = 0x4, offset = 0x4, fixed_abs, tag = 'smem constant byte address 0x4 - core index']
  #allocation1 [shape = 'u32[144,128]{1,0:T(1,128)}', space=vmem, size = 0x12000, scoped, tag = 'internal scratch']
  #allocation2 [shape = 'f32[64,128]{1,0:T(8,128)}', space=vmem, size = 0x8000, scoped, tag = 'scratch operand']
  #allocation3 [shape = 'f32[64,32]{1,0:T(8,128)}', space=vmem, size = 0x8000, scoped, tag = 'scratch operand']
  %s0 = inlined_call_operand.vmem [shape: f32[64,16], index: 0, kind: input, shape index: {}]
  %s1 = inlined_call_operand.vmem [shape: f32[16,128], index: 1, kind: input, shape index: {}]
  %s2 = inlined_call_operand.vmem [shape: f32[32,128], index: 2, kind: input, shape index: {}]
  %s3 = inlined_call_operand.vmem [shape: f32[1,128], index: 3, kind: input, shape index: {}]
  %s4 = inlined_call_operand.vmem [shape: f32[32,128], index: 4, kind: input, shape index: {}]
  %s5 = inlined_call_operand.vmem [shape: f32[1,128], index: 5, kind: input, shape index: {}]
  %s6 = inlined_call_operand.hbm [shape: f32[64,128], index: 6, kind: output, shape index: {}]
  %s7 = sld [smem:[#allocation0]]
  $region34: #{tpu_custom_call.1} parent=0
    _
  %s9 = ssub.s32 1, %s7
  %s10 = scalar_select 0, %s9, %s7
  $region1: #{tpu_custom_call.1} parent=0
    #allocation4 [shape = 'u8[32768]{0}', space=vmem, size = 0x8000, scoped, tag = 'output window, operand 0, single buffered']
    #allocation5 [shape = 's32[1]{0}', space=sflag, size = 0x4, scoped, tag = 'scoped memory for tpu_custom_call.1']
    %11 = vsyncpa [#allocation5], 0
    // Predicated region
    $region2: #{tpu_custom_call.1} parent=1 // pred_check
      _
    $region3: #{tpu_custom_call.1} parent=1 // pred_check_branch
      %13 = sbr.rel (0) target = $region5
    $region4: #{tpu_custom_call.1} parent=1 // pred_region
      _
    $region5: #{tpu_custom_call.1} parent=1 // pred_fallthru
      _
    // Predicated region
    $region6: #{tpu_custom_call.1} parent=1 // pred_check
      _
    $region7: #{tpu_custom_call.1} parent=1 // pred_check_branch
      %15 = sbr.rel (0) target = $region9
    $region8: #{tpu_custom_call.1} parent=1 // pred_region
      _
    $region9: #{tpu_custom_call.1} parent=1 // pred_fallthru
      _
    // Predicated region
    $region10: #{tpu_custom_call.1} parent=1 // pred_check
      _
    $region11: #{tpu_custom_call.1} parent=1 // pred_check_branch
      %17 = sbr.rel (0) target = $region13
    $region12: #{tpu_custom_call.1} parent=1 // pred_region
      _
    $region13: #{tpu_custom_call.1} parent=1 // pred_fallthru
      _
    // Predicated region
    $region14: #{tpu_custom_call.1} parent=1 // pred_check
      _
    $region15: #{tpu_custom_call.1} parent=1 // pred_check_branch
      %19 = sbr.rel (0) target = $region17
    $region16: #{tpu_custom_call.1} parent=1 // pred_region
      _
    $region17: #{tpu_custom_call.1} parent=1 // pred_fallthru
      _
    // Predicated region
    $region18: #{tpu_custom_call.1} parent=1 // pred_check
      _
    $region19: #{tpu_custom_call.1} parent=1 // pred_check_branch
      %21 = sbr.rel (0) target = $region21
    $region20: #{tpu_custom_call.1} parent=1 // pred_region
      _
    $region21: #{tpu_custom_call.1} parent=1 // pred_fallthru
      _
    // Predicated region
    $region22: #{tpu_custom_call.1} parent=1 // pred_check
      _
    $region23: #{tpu_custom_call.1} parent=1 // pred_check_branch
      %23 = sbr.rel (0) target = $region25
    $region24: #{tpu_custom_call.1} parent=1 // pred_region
      _
    $region25: #{tpu_custom_call.1} parent=1 // pred_fallthru
      _
    %v24 = vld [vmem:[%s0] sm:$0xff]
    %v25 = vld [vmem:[%s0 + $0x8] sm:$0xff]
    %v26 = vld [vmem:[%s0 + $0x10] sm:$0xff]
    %v27 = vld [vmem:[%s0 + $0x18] sm:$0xff]
    %v28 = vld [vmem:[%s0 + $0x20] sm:$0xff]
    %v29 = vld [vmem:[%s0 + $0x28] sm:$0xff]
    %v30 = vld [vmem:[%s0 + $0x30] sm:$0xff]
    %v31 = vld [vmem:[%s0 + $0x38] sm:$0xff]
    %v32 = vld [vmem:[%s1] sm:$0xff]
    %v33 = vld [vmem:[%s1 + $0x8] sm:$0xff]
    %v34 = vld [vmem:[%s3] sm:$0x1]
    %v36 = vlaneseq
    %v37 = vshrl.u32 %v36, 7
    %v38 = vsub.s32 0, %v37
    %v39 = vrot.slane %v34, %v38
    %vm41 = vcmask 130048
    %v43 = vsel %vm41, %v24, 0
    %v46 = vsel %vm41, %v25, 0
    %v49 = vsel %vm41, %v26, 0
    %v52 = vsel %vm41, %v27, 0
    %v55 = vsel %vm41, %v28, 0
    %v58 = vsel %vm41, %v29, 0
    %v61 = vsel %vm41, %v30, 0
    %v64 = vsel %vm41, %v31, 0
    %66 = vmatprep.subr.mxu0 0.0
    %67 = vmatpush1.msra.mxu0 %v32
    %68 = vmatprep.subr.mxu0 0.0
    %69 = vmatpush1.msra.mxu0 %v33
    %70 = vmatprep.subr.mxu0 0.0
    %71 = vmatpush1.msra.mxu0 0.0
    %72 = vmatprep.subr.mxu0 0.0
    %73 = vmatpush1.msra.mxu0 0.0
    %74 = vmatprep.subr.mxu0 0.0
    %75 = vmatpush1.msra.mxu0 0.0
    %76 = vmatprep.subr.mxu0 0.0
    %77 = vmatpush1.msra.mxu0 0.0
    %78 = vmatprep.subr.mxu0 0.0
    %79 = vmatpush1.msra.mxu0 0.0
    %80 = vmatprep.subr.mxu0 0.0
    %81 = vmatpush1.msra.mxu0 0.0
    %82 = vmatprep.subr.mxu0 0.0
    %83 = vmatpush1.msra.mxu0 0.0
    %84 = vmatprep.subr.mxu0 0.0
    %85 = vmatpush1.msra.mxu0 0.0
    %86 = vmatprep.subr.mxu0 0.0
    %87 = vmatpush1.msra.mxu0 0.0
    %88 = vmatprep.subr.mxu0 0.0
    %89 = vmatpush1.msra.mxu0 0.0
    %90 = vmatprep.subr.mxu0 0.0
    %91 = vmatpush1.msra.mxu0 0.0
    %92 = vmatprep.subr.mxu0 0.0
    %93 = vmatpush1.msra.mxu0 0.0
    %94 = vmatprep.subr.mxu0 0.0
    %95 = vmatpush1.msra.mxu0 0.0
    %96 = vmatprep.subr.mxu0 0.0
    %97 = vmatpush1.msra.mxu0 0.0
    %98 = vmatprep.subr.mxu0 0.0
    %99 = vmatpush1.msra.mxu0 0.0
    %100 = vmatprep.subr.mxu0 0.0
    %101 = vmatpush1.msra.mxu0 0.0
    %102 = vmatprep.subr.mxu0 0.0
    %103 = vmatpush1.msra.mxu0 0.0
    %104 = vmatprep.subr.mxu0 0.0
    %105 = vmatpush1.msra.mxu0 0.0
    %106 = vmatprep.subr.mxu0 0.0
    %107 = vmatpush1.msra.mxu0 0.0
    %108 = vmatprep.subr.mxu0 0.0
    %109 = vmatpush1.msra.mxu0 0.0
    %110 = vmatprep.subr.mxu0 0.0
    %111 = vmatpush1.msra.mxu0 0.0
    %112 = vmatprep.subr.mxu0 0.0
    %113 = vmatpush1.msra.mxu0 0.0
    %114 = vmatprep.subr.mxu0 0.0
    %115 = vmatpush1.msra.mxu0 0.0
    %116 = vmatprep.subr.mxu0 0.0
    %117 = vmatpush1.msra.mxu0 0.0
    %118 = vmatprep.subr.mxu0 0.0
    %119 = vmatpush1.msra.mxu0 0.0
    %120 = vmatprep.subr.mxu0 0.0
    %121 = vmatpush1.msra.mxu0 0.0
    %122 = vmatprep.subr.mxu0 0.0
    %123 = vmatpush1.msra.mxu0 0.0
    %124 = vmatprep.subr.mxu0 0.0
    %125 = vmatpush1.msra.mxu0 0.0
    %126 = vmatprep.subr.mxu0 0.0
    %127 = vmatpush1.msra.mxu0 0.0
    %128 = vmatprep.subr.mxu0 0.0
    %129 = vmatpush1.msra.mxu0 0.0
    %130 = vmatprep.mubr.f32.mxu0 0.0
    %131 = vmatmul.mubr.f32.gmra.mrb[0].mxu0 %v43
    %v132 = vpop.f32.mrb[0].mxu0
    %v133 = vadd.f32 %v39, %v132
    %v134 = vpop.f32.mrb[0].mxu0
    %135 = vmatprep.mubr.f32.mxu0 0.0
    %136 = vmatmul.mubr.f32.gmra.mrb[0].mxu0 %v46
    %v137 = vpop.f32.mrb[0].mxu0
    %v138 = vadd.f32 %v39, %v137
    %v139 = vpop.f32.mrb[0].mxu0
    %140 = vmatprep.mubr.f32.mxu0 0.0
    %141 = vmatmul.mubr.f32.gmra.mrb[0].mxu0 %v49
    %v142 = vpop.f32.mrb[0].mxu0
    %v143 = vadd.f32 %v39, %v142
    %v144 = vpop.f32.mrb[0].mxu0
    %145 = vmatprep.mubr.f32.mxu0 0.0
    %146 = vmatmul.mubr.f32.gmra.mrb[0].mxu0 %v52
    %v147 = vpop.f32.mrb[0].mxu0
    %v148 = vadd.f32 %v39, %v147
    %v149 = vpop.f32.mrb[0].mxu0
    %150 = vmatprep.mubr.f32.mxu0 0.0
    %151 = vmatmul.mubr.f32.gmra.mrb[0].mxu0 %v55
    %v152 = vpop.f32.mrb[0].mxu0
    %v153 = vadd.f32 %v39, %v152
    %v154 = vpop.f32.mrb[0].mxu0
    %155 = vmatprep.mubr.f32.mxu0 0.0
    %156 = vmatmul.mubr.f32.gmra.mrb[0].mxu0 %v58
    %v157 = vpop.f32.mrb[0].mxu0
    %v158 = vadd.f32 %v39, %v157
    %v159 = vpop.f32.mrb[0].mxu0
    %160 = vmatprep.mubr.f32.mxu0 0.0
    %161 = vmatmul.mubr.f32.gmra.mrb[0].mxu0 %v61
    %v162 = vpop.f32.mrb[0].mxu0
    %v163 = vadd.f32 %v39, %v162
    %v164 = vpop.f32.mrb[0].mxu0
    %165 = vmatprep.mubr.f32.mxu0 0.0
    %166 = vmatmul.mubr.f32.gmra.mrb[0].mxu0 %v64
    %v167 = vpop.f32.mrb[0].mxu0
    %v168 = vadd.f32 %v39, %v167
    %v169 = vpop.f32.mrb[0].mxu0
    %170 = vdwg.mxu0
    %171 = vst [vmem:[#allocation2] sm:$0xff] %v133
    %172 = vst [vmem:[#allocation2 + $0x8] sm:$0xff] %v138
    %173 = vst [vmem:[#allocation2 + $0x10] sm:$0xff] %v143
    %174 = vst [vmem:[#allocation2 + $0x18] sm:$0xff] %v148
    %175 = vst [vmem:[#allocation2 + $0x20] sm:$0xff] %v153
    %176 = vst [vmem:[#allocation2 + $0x28] sm:$0xff] %v158
    %177 = vst [vmem:[#allocation2 + $0x30] sm:$0xff] %v163
    %178 = vst [vmem:[#allocation2 + $0x38] sm:$0xff] %v168
    %v179 = vld [vmem:[%s2] sm:$0xff]
    %v180 = vld [vmem:[%s2 + $0x8] sm:$0xff]
    %v181 = vld [vmem:[%s2 + $0x10] sm:$0xff]
    %v182 = vld [vmem:[%s2 + $0x18] sm:$0xff]
    %v183 = vld [vmem:[#allocation2] sm:$0xff]
    %vm184 = vcmask 261120
    %v186 = vsel %vm184, 0.0, 0
    %188 = vmatprep.subr.mxu0 0.0
    %189 = vmatpush1.msra.mxu0 %v179
    %190 = vmatprep.subr.mxu0 0.0
    %191 = vmatpush1.msra.mxu0 %v180
    %192 = vmatprep.subr.mxu0 0.0
    %193 = vmatpush1.msra.mxu0 %v181
    %194 = vmatprep.subr.mxu0 0.0
    %195 = vmatpush1.msra.mxu0 %v182
    %196 = vmatprep.subr.mxu0 0.0
    %197 = vmatpush1.msra.mxu0 0.0
    %198 = vmatprep.subr.mxu0 0.0
    %199 = vmatpush1.msra.mxu0 0.0
    %200 = vmatprep.subr.mxu0 0.0
    %201 = vmatpush1.msra.mxu0 0.0
    %202 = vmatprep.subr.mxu0 0.0
    %203 = vmatpush1.msra.mxu0 0.0
    %204 = vmatprep.subr.mxu0 0.0
    %205 = vmatpush1.msra.mxu0 0.0
    %206 = vmatprep.subr.mxu0 0.0
    %207 = vmatpush1.msra.mxu0 0.0
    %208 = vmatprep.subr.mxu0 0.0
    %209 = vmatpush1.msra.mxu0 0.0
    %210 = vmatprep.subr.mxu0 0.0
    %211 = vmatpush1.msra.mxu0 0.0
    %212 = vmatprep.subr.mxu0 0.0
    %213 = vmatpush1.msra.mxu0 0.0
    %214 = vmatprep.subr.mxu0 0.0
    %215 = vmatpush1.msra.mxu0 0.0
    %216 = vmatprep.subr.mxu0 0.0
    %217 = vmatpush1.msra.mxu0 0.0
    %218 = vmatprep.subr.mxu0 0.0
    %219 = vmatpush1.msra.mxu0 0.0
    %220 = vmatprep.subr.mxu0 0.0
    %221 = vmatpush1.msra.mxu0 0.0
    %222 = vmatprep.subr.mxu0 0.0
    %223 = vmatpush1.msra.mxu0 0.0
    %224 = vmatprep.subr.mxu0 0.0
    %225 = vmatpush1.msra.mxu0 0.0
    %226 = vmatprep.subr.mxu0 0.0
    %227 = vmatpush1.msra.mxu0 0.0
    %228 = vmatprep.subr.mxu0 0.0
    %229 = vmatpush1.msra.mxu0 0.0
    %230 = vmatprep.subr.mxu0 0.0
    %231 = vmatpush1.msra.mxu0 0.0
    %232 = vmatprep.subr.mxu0 0.0
    %233 = vmatpush1.msra.mxu0 0.0
    %234 = vmatprep.subr.mxu0 0.0
    %235 = vmatpush1.msra.mxu0 0.0
    %236 = vmatprep.subr.mxu0 0.0
    %237 = vmatpush1.msra.mxu0 0.0
    %238 = vmatprep.subr.mxu0 0.0
    %239 = vmatpush1.msra.mxu0 0.0
    %240 = vmatprep.subr.mxu0 0.0
    %241 = vmatpush1.msra.mxu0 0.0
    %242 = vmatprep.subr.mxu0 0.0
    %243 = vmatpush1.msra.mxu0 0.0
    %244 = vmatprep.subr.mxu0 0.0
    %245 = vmatpush1.msra.mxu0 0.0
    %246 = vmatprep.subr.mxu0 0.0
    %247 = vmatpush1.msra.mxu0 0.0
    %248 = vmatprep.subr.mxu0 0.0
    %249 = vmatpush1.msra.mxu0 0.0
    %250 = vmatprep.subr.mxu0 0.0
    %251 = vmatpush1.msra.mxu0 0.0
    %252 = vmatprep.mubr.f32.mxu0 0.0
    %253 = vmatmul.mubr.f32.gmra.mrb[0].mxu0 %v186
    %v254 = vpop.f32.mrb[0].mxu0
    %v255 = vadd.f32 0.0, %v254
    %v256 = vpop.f32.mrb[0].mxu0
    %257 = vdwg.mxu0
    %v258 = vadd.f32 %v183, %v255
    %v259 = vxor.u32 %v258, 2147483648
    %v260 = vmul.f32 %v259, 1.442695
    %v261 = vpow.pop %v260
    %v262 = vadd.f32 %v261, 1.0
    %v263 = vrcp.pop %v262
    %v264 = vmul.f32 1.0, %v263
    %v265 = vtanh.pop %v258
    %v266 = vmul.f32 %v264, 0.0
    %268 = vrot.lane.b32.xlu0 %v265, 64
    %v269 = vpop.permute.xlu0 %268
    %v271 = vmul.f32 %v264, %v269
    %273 = vrot.lane.b32.xlu0 %v271, 32
    %v274 = vpop.permute.xlu0 %273
    %v276 = vadd.f32 %v266, %v274
    %v277 = vtanh.pop %v276
    %279 = vrot.lane.b32.xlu0 %v277, 64
    %v280 = vpop.permute.xlu0 %279
    %v282 = vmul.f32 %v264, %v280
    %284 = vrot.lane.b32.xlu0 %v282, 32
    %v285 = vpop.permute.xlu0 %284
    %287 = vst.msk [vmem:[#allocation3] sm:$0xff] %vm184, %v285
    %s288 = scalar_lea.vmem [#allocation2], 8
    %v289 = vld [vmem:[%s288] sm:$0xff]
    %v290 = vsel %vm184, %v285, 0
    %292 = vmatprep.subr.mxu0 0.0
    %293 = vmatpush1.msra.mxu0 %v179
    %294 = vmatprep.subr.mxu0 0.0
    %295 = vmatpush1.msra.mxu0 %v180
    %296 = vmatprep.subr.mxu0 0.0
    %297 = vmatpush1.msra.mxu0 %v181
    %298 = vmatprep.subr.mxu0 0.0
    %299 = vmatpush1.msra.mxu0 %v182
    %300 = vmatprep.subr.mxu0 0.0
    %301 = vmatpush1.msra.mxu0 0.0
    %302 = vmatprep.subr.mxu0 0.0
    %303 = vmatpush1.msra.mxu0 0.0
    %304 = vmatprep.subr.mxu0 0.0
    %305 = vmatpush1.msra.mxu0 0.0
    %306 = vmatprep.subr.mxu0 0.0
    %307 = vmatpush1.msra.mxu0 0.0
    %308 = vmatprep.subr.mxu0 0.0
    %309 = vmatpush1.msra.mxu0 0.0
    %310 = vmatprep.subr.mxu0 0.0
    %311 = vmatpush1.msra.mxu0 0.0
    %312 = vmatprep.subr.mxu0 0.0
    %313 = vmatpush1.msra.mxu0 0.0
    %314 = vmatprep.subr.mxu0 0.0
    %315 = vmatpush1.msra.mxu0 0.0
    %316 = vmatprep.subr.mxu0 0.0
    %317 = vmatpush1.msra.mxu0 0.0
    %318 = vmatprep.subr.mxu0 0.0
    %319 = vmatpush1.msra.mxu0 0.0
    %320 = vmatprep.subr.mxu0 0.0
    %321 = vmatpush1.msra.mxu0 0.0
    %322 = vmatprep.subr.mxu0 0.0
    %323 = vmatpush1.msra.mxu0 0.0
    %324 = vmatprep.subr.mxu0 0.0
    %325 = vmatpush1.msra.mxu0 0.0
    %326 = vmatprep.subr.mxu0 0.0
    %327 = vmatpush1.msra.mxu0 0.0
    %328 = vmatprep.subr.mxu0 0.0
    %329 = vmatpush1.msra.mxu0 0.0
    %330 = vmatprep.subr.mxu0 0.0
    %331 = vmatpush1.msra.mxu0 0.0
    %332 = vmatprep.subr.mxu0 0.0
    %333 = vmatpush1.msra.mxu0 0.0
    %334 = vmatprep.subr.mxu0 0.0
    %335 = vmatpush1.msra.mxu0 0.0
    %336 = vmatprep.subr.mxu0 0.0
    %337 = vmatpush1.msra.mxu0 0.0
    %338 = vmatprep.subr.mxu0 0.0
    %339 = vmatpush1.msra.mxu0 0.0
    %340 = vmatprep.subr.mxu0 0.0
    %341 = vmatpush1.msra.mxu0 0.0
    %342 = vmatprep.subr.mxu0 0.0
    %343 = vmatpush1.msra.mxu0 0.0
    %344 = vmatprep.subr.mxu0 0.0
    %345 = vmatpush1.msra.mxu0 0.0
    %346 = vmatprep.subr.mxu0 0.0
    %347 = vmatpush1.msra.mxu0 0.0
    %348 = vmatprep.subr.mxu0 0.0
    %349 = vmatpush1.msra.mxu0 0.0
    %350 = vmatprep.subr.mxu0 0.0
    %351 = vmatpush1.msra.mxu0 0.0
    %352 = vmatprep.subr.mxu0 0.0
    %353 = vmatpush1.msra.mxu0 0.0
    %354 = vmatprep.subr.mxu0 0.0
    %355 = vmatpush1.msra.mxu0 0.0
    %356 = vmatprep.mubr.f32.mxu0 0.0
    %357 = vmatmul.mubr.f32.gmra.mrb[0].mxu0 %v290
    %v358 = vpop.f32.mrb[0].mxu0
    %v359 = vadd.f32 0.0, %v358
    %v360 = vpop.f32.mrb[0].mxu0
    %361 = vdwg.mxu0
    %v362 = vadd.f32 %v289, %v359
    %v363 = vxor.u32 %v362, 2147483648
    %v364 = vmul.f32 %v363, 1.442695
    %v365 = vpow.pop %v364
    %v366 = vadd.f32 %v365, 1.0
    %v367 = vrcp.pop %v366
    %v368 = vmul.f32 1.0, %v367
    %v369 = vtanh.pop %v362
    %v370 = vmul.f32 %v368, %v276
    %372 = vrot.lane.b32.xlu0 %v369, 64
    %v373 = vpop.permute.xlu0 %372
    %v375 = vmul.f32 %v368, %v373
    %377 = vrot.lane.b32.xlu0 %v375, 32
    %v378 = vpop.permute.xlu0 %377
    %v380 = vadd.f32 %v370, %v378
    %v381 = vtanh.pop %v380
    %383 = vrot.lane.b32.xlu0 %v381, 64
    %v384 = vpop.permute.xlu0 %383
    %v386 = vmul.f32 %v368, %v384
    %388 = vrot.lane.b32.xlu0 %v386, 32
    %v389 = vpop.permute.xlu0 %388
    %s391 = scalar_lea.vmem [#allocation3], 8
    %392 = vst.msk [vmem:[%s391] sm:$0xff] %vm184, %v389
    %s393 = scalar_lea.vmem [#allocation2], 16
    %v394 = vld [vmem:[%s393] sm:$0xff]
    %v395 = vsel %vm184, %v389, 0
    %397 = vmatprep.subr.mxu0 0.0
    %398 = vmatpush1.msra.mxu0 %v179
    %399 = vmatprep.subr.mxu0 0.0
    %400 = vmatpush1.msra.mxu0 %v180
    %401 = vmatprep.subr.mxu0 0.0
    %402 = vmatpush1.msra.mxu0 %v181
    %403 = vmatprep.subr.mxu0 0.0
    %404 = vmatpush1.msra.mxu0 %v182
    %405 = vmatprep.subr.mxu0 0.0
    %406 = vmatpush1.msra.mxu0 0.0
    %407 = vmatprep.subr.mxu0 0.0
    %408 = vmatpush1.msra.mxu0 0.0
    %409 = vmatprep.subr.mxu0 0.0
    %410 = vmatpush1.msra.mxu0 0.0
    %411 = vmatprep.subr.mxu0 0.0
    %412 = vmatpush1.msra.mxu0 0.0
    %413 = vmatprep.subr.mxu0 0.0
    %414 = vmatpush1.msra.mxu0 0.0
    %415 = vmatprep.subr.mxu0 0.0
    %416 = vmatpush1.msra.mxu0 0.0
    %417 = vmatprep.subr.mxu0 0.0
    %418 = vmatpush1.msra.mxu0 0.0
    %419 = vmatprep.subr.mxu0 0.0
    %420 = vmatpush1.msra.mxu0 0.0
    %421 = vmatprep.subr.mxu0 0.0
    %422 = vmatpush1.msra.mxu0 0.0
    %423 = vmatprep.subr.mxu0 0.0
    %424 = vmatpush1.msra.mxu0 0.0
    %425 = vmatprep.subr.mxu0 0.0
    %426 = vmatpush1.msra.mxu0 0.0
    %427 = vmatprep.subr.mxu0 0.0
    %428 = vmatpush1.msra.mxu0 0.0
    %429 = vmatprep.subr.mxu0 0.0
    %430 = vmatpush1.msra.mxu0 0.0
    %431 = vmatprep.subr.mxu0 0.0
    %432 = vmatpush1.msra.mxu0 0.0
    %433 = vmatprep.subr.mxu0 0.0
    %434 = vmatpush1.msra.mxu0 0.0
    %435 = vmatprep.subr.mxu0 0.0
    %436 = vmatpush1.msra.mxu0 0.0
    %437 = vmatprep.subr.mxu0 0.0
    %438 = vmatpush1.msra.mxu0 0.0
    %439 = vmatprep.subr.mxu0 0.0
    %440 = vmatpush1.msra.mxu0 0.0
    %441 = vmatprep.subr.mxu0 0.0
    %442 = vmatpush1.msra.mxu0 0.0
    %443 = vmatprep.subr.mxu0 0.0
    %444 = vmatpush1.msra.mxu0 0.0
    %445 = vmatprep.subr.mxu0 0.0
    %446 = vmatpush1.msra.mxu0 0.0
    %447 = vmatprep.subr.mxu0 0.0
    %448 = vmatpush1.msra.mxu0 0.0
    %449 = vmatprep.subr.mxu0 0.0
    %450 = vmatpush1.msra.mxu0 0.0
    %451 = vmatprep.subr.mxu0 0.0
    %452 = vmatpush1.msra.mxu0 0.0
    %453 = vmatprep.subr.mxu0 0.0
    %454 = vmatpush1.msra.mxu0 0.0
    %455 = vmatprep.subr.mxu0 0.0
    %456 = vmatpush1.msra.mxu0 0.0
    %457 = vmatprep.subr.mxu0 0.0
    %458 = vmatpush1.msra.mxu0 0.0
    %459 = vmatprep.subr.mxu0 0.0
    %460 = vmatpush1.msra.mxu0 0.0
    %461 = vmatprep.mubr.f32.mxu0 0.0
    %462 = vmatmul.mubr.f32.gmra.mrb[0].mxu0 %v395
    %v463 = vpop.f32.mrb[0].mxu0
    %v464 = vadd.f32 0.0, %v463
    %v465 = vpop.f32.mrb[0].mxu0
    %466 = vdwg.mxu0
    %v467 = vadd.f32 %v394, %v464
    %v468 = vxor.u32 %v467, 2147483648
    %v469 = vmul.f32 %v468, 1.442695
    %v470 = vpow.pop %v469
    %v471 = vadd.f32 %v470, 1.0
    %v472 = vrcp.pop %v471
    %v473 = vmul.f32 1.0, %v472
    %v474 = vtanh.pop %v467
    %v475 = vmul.f32 %v473, %v380
    %477 = vrot.lane.b32.xlu0 %v474, 64
    %v478 = vpop.permute.xlu0 %477
    %v480 = vmul.f32 %v473, %v478
    %482 = vrot.lane.b32.xlu0 %v480, 32
    %v483 = vpop.permute.xlu0 %482
    %v485 = vadd.f32 %v475, %v483
    %v486 = vtanh.pop %v485
    %488 = vrot.lane.b32.xlu0 %v486, 64
    %v489 = vpop.permute.xlu0 %488
    %v491 = vmul.f32 %v473, %v489
    %493 = vrot.lane.b32.xlu0 %v491, 32
    %v494 = vpop.permute.xlu0 %493
    %s496 = scalar_lea.vmem [#allocation3], 16
    %497 = vst.msk [vmem:[%s496] sm:$0xff] %vm184, %v494
    %s498 = scalar_lea.vmem [#allocation2], 24
    %v499 = vld [vmem:[%s498] sm:$0xff]
    %v500 = vsel %vm184, %v494, 0
    %502 = vmatprep.subr.mxu0 0.0
    %503 = vmatpush1.msra.mxu0 %v179
    %504 = vmatprep.subr.mxu0 0.0
    %505 = vmatpush1.msra.mxu0 %v180
    %506 = vmatprep.subr.mxu0 0.0
    %507 = vmatpush1.msra.mxu0 %v181
    %508 = vmatprep.subr.mxu0 0.0
    %509 = vmatpush1.msra.mxu0 %v182
    %510 = vmatprep.subr.mxu0 0.0
    %511 = vmatpush1.msra.mxu0 0.0
    %512 = vmatprep.subr.mxu0 0.0
    %513 = vmatpush1.msra.mxu0 0.0
    %514 = vmatprep.subr.mxu0 0.0
    %515 = vmatpush1.msra.mxu0 0.0
    %516 = vmatprep.subr.mxu0 0.0
    %517 = vmatpush1.msra.mxu0 0.0
    %518 = vmatprep.subr.mxu0 0.0
    %519 = vmatpush1.msra.mxu0 0.0
    %520 = vmatprep.subr.mxu0 0.0
    %521 = vmatpush1.msra.mxu0 0.0
    %522 = vmatprep.subr.mxu0 0.0
    %523 = vmatpush1.msra.mxu0 0.0
    %524 = vmatprep.subr.mxu0 0.0
    %525 = vmatpush1.msra.mxu0 0.0
    %526 = vmatprep.subr.mxu0 0.0
    %527 = vmatpush1.msra.mxu0 0.0
    %528 = vmatprep.subr.mxu0 0.0
    %529 = vmatpush1.msra.mxu0 0.0
    %530 = vmatprep.subr.mxu0 0.0
    %531 = vmatpush1.msra.mxu0 0.0
    %532 = vmatprep.subr.mxu0 0.0
    %533 = vmatpush1.msra.mxu0 0.0
    %534 = vmatprep.subr.mxu0 0.0
    %535 = vmatpush1.msra.mxu0 0.0
    %536 = vmatprep.subr.mxu0 0.0
    %537 = vmatpush1.msra.mxu0 0.0
    %538 = vmatprep.subr.mxu0 0.0
    %539 = vmatpush1.msra.mxu0 0.0
    %540 = vmatprep.subr.mxu0 0.0
    %541 = vmatpush1.msra.mxu0 0.0
    %542 = vmatprep.subr.mxu0 0.0
    %543 = vmatpush1.msra.mxu0 0.0
    %544 = vmatprep.subr.mxu0 0.0
    %545 = vmatpush1.msra.mxu0 0.0
    %546 = vmatprep.subr.mxu0 0.0
    %547 = vmatpush1.msra.mxu0 0.0
    %548 = vmatprep.subr.mxu0 0.0
    %549 = vmatpush1.msra.mxu0 0.0
    %550 = vmatprep.subr.mxu0 0.0
    %551 = vmatpush1.msra.mxu0 0.0
    %552 = vmatprep.subr.mxu0 0.0
    %553 = vmatpush1.msra.mxu0 0.0
    %554 = vmatprep.subr.mxu0 0.0
    %555 = vmatpush1.msra.mxu0 0.0
    %556 = vmatprep.subr.mxu0 0.0
    %557 = vmatpush1.msra.mxu0 0.0
    %558 = vmatprep.subr.mxu0 0.0
    %559 = vmatpush1.msra.mxu0 0.0
    %560 = vmatprep.subr.mxu0 0.0
    %561 = vmatpush1.msra.mxu0 0.0
    %562 = vmatprep.subr.mxu0 0.0
    %563 = vmatpush1.msra.mxu0 0.0
    %564 = vmatprep.subr.mxu0 0.0
    %565 = vmatpush1.msra.mxu0 0.0
    %566 = vmatprep.mubr.f32.mxu0 0.0
    %567 = vmatmul.mubr.f32.gmra.mrb[0].mxu0 %v500
    %v568 = vpop.f32.mrb[0].mxu0
    %v569 = vadd.f32 0.0, %v568
    %v570 = vpop.f32.mrb[0].mxu0
    %571 = vdwg.mxu0
    %v572 = vadd.f32 %v499, %v569
    %v573 = vxor.u32 %v572, 2147483648
    %v574 = vmul.f32 %v573, 1.442695
    %v575 = vpow.pop %v574
    %v576 = vadd.f32 %v575, 1.0
    %v577 = vrcp.pop %v576
    %v578 = vmul.f32 1.0, %v577
    %v579 = vtanh.pop %v572
    %v580 = vmul.f32 %v578, %v485
    %582 = vrot.lane.b32.xlu0 %v579, 64
    %v583 = vpop.permute.xlu0 %582
    %v585 = vmul.f32 %v578, %v583
    %587 = vrot.lane.b32.xlu0 %v585, 32
    %v588 = vpop.permute.xlu0 %587
    %v590 = vadd.f32 %v580, %v588
    %v591 = vtanh.pop %v590
    %593 = vrot.lane.b32.xlu0 %v591, 64
    %v594 = vpop.permute.xlu0 %593
    %v596 = vmul.f32 %v578, %v594
    %598 = vrot.lane.b32.xlu0 %v596, 32
    %v599 = vpop.permute.xlu0 %598
    %s601 = scalar_lea.vmem [#allocation3], 24
    %602 = vst.msk [vmem:[%s601] sm:$0xff] %vm184, %v599
    %s603 = scalar_lea.vmem [#allocation2], 32
    %v604 = vld [vmem:[%s603] sm:$0xff]
    %v605 = vsel %vm184, %v599, 0
    %607 = vmatprep.subr.mxu0 0.0
    %608 = vmatpush1.msra.mxu0 %v179
    %609 = vmatprep.subr.mxu0 0.0
    %610 = vmatpush1.msra.mxu0 %v180
    %611 = vmatprep.subr.mxu0 0.0
    %612 = vmatpush1.msra.mxu0 %v181
    %613 = vmatprep.subr.mxu0 0.0
    %614 = vmatpush1.msra.mxu0 %v182
    %615 = vmatprep.subr.mxu0 0.0
    %616 = vmatpush1.msra.mxu0 0.0
    %617 = vmatprep.subr.mxu0 0.0
    %618 = vmatpush1.msra.mxu0 0.0
    %619 = vmatprep.subr.mxu0 0.0
    %620 = vmatpush1.msra.mxu0 0.0
    %621 = vmatprep.subr.mxu0 0.0
    %622 = vmatpush1.msra.mxu0 0.0
    %623 = vmatprep.subr.mxu0 0.0
    %624 = vmatpush1.msra.mxu0 0.0
    %625 = vmatprep.subr.mxu0 0.0
    %626 = vmatpush1.msra.mxu0 0.0
    %627 = vmatprep.subr.mxu0 0.0
    %628 = vmatpush1.msra.mxu0 0.0
    %629 = vmatprep.subr.mxu0 0.0
    %630 = vmatpush1.msra.mxu0 0.0
    %631 = vmatprep.subr.mxu0 0.0
    %632 = vmatpush1.msra.mxu0 0.0
    %633 = vmatprep.subr.mxu0 0.0
    %634 = vmatpush1.msra.mxu0 0.0
    %635 = vmatprep.subr.mxu0 0.0
    %636 = vmatpush1.msra.mxu0 0.0
    %637 = vmatprep.subr.mxu0 0.0
    %638 = vmatpush1.msra.mxu0 0.0
    %639 = vmatprep.subr.mxu0 0.0
    %640 = vmatpush1.msra.mxu0 0.0
    %641 = vmatprep.subr.mxu0 0.0
    %642 = vmatpush1.msra.mxu0 0.0
    %643 = vmatprep.subr.mxu0 0.0
    %644 = vmatpush1.msra.mxu0 0.0
    %645 = vmatprep.subr.mxu0 0.0
    %646 = vmatpush1.msra.mxu0 0.0
    %647 = vmatprep.subr.mxu0 0.0
    %648 = vmatpush1.msra.mxu0 0.0
    %649 = vmatprep.subr.mxu0 0.0
    %650 = vmatpush1.msra.mxu0 0.0
    %651 = vmatprep.subr.mxu0 0.0
    %652 = vmatpush1.msra.mxu0 0.0
    %653 = vmatprep.subr.mxu0 0.0
    %654 = vmatpush1.msra.mxu0 0.0
    %655 = vmatprep.subr.mxu0 0.0
    %656 = vmatpush1.msra.mxu0 0.0
    %657 = vmatprep.subr.mxu0 0.0
    %658 = vmatpush1.msra.mxu0 0.0
    %659 = vmatprep.subr.mxu0 0.0
    %660 = vmatpush1.msra.mxu0 0.0
    %661 = vmatprep.subr.mxu0 0.0
    %662 = vmatpush1.msra.mxu0 0.0
    %663 = vmatprep.subr.mxu0 0.0
    %664 = vmatpush1.msra.mxu0 0.0
    %665 = vmatprep.subr.mxu0 0.0
    %666 = vmatpush1.msra.mxu0 0.0
    %667 = vmatprep.subr.mxu0 0.0
    %668 = vmatpush1.msra.mxu0 0.0
    %669 = vmatprep.subr.mxu0 0.0
    %670 = vmatpush1.msra.mxu0 0.0
    %671 = vmatprep.mubr.f32.mxu0 0.0
    %672 = vmatmul.mubr.f32.gmra.mrb[0].mxu0 %v605
    %v673 = vpop.f32.mrb[0].mxu0
    %v674 = vadd.f32 0.0, %v673
    %v675 = vpop.f32.mrb[0].mxu0
    %676 = vdwg.mxu0
    %v677 = vadd.f32 %v604, %v674
    %v678 = vxor.u32 %v677, 2147483648
    %v679 = vmul.f32 %v678, 1.442695
    %v680 = vpow.pop %v679
    %v681 = vadd.f32 %v680, 1.0
    %v682 = vrcp.pop %v681
    %v683 = vmul.f32 1.0, %v682
    %v684 = vtanh.pop %v677
    %v685 = vmul.f32 %v683, %v590
    %687 = vrot.lane.b32.xlu0 %v684, 64
    %v688 = vpop.permute.xlu0 %687
    %v690 = vmul.f32 %v683, %v688
    %692 = vrot.lane.b32.xlu0 %v690, 32
    %v693 = vpop.permute.xlu0 %692
    %v695 = vadd.f32 %v685, %v693
    %v696 = vtanh.pop %v695
    %698 = vrot.lane.b32.xlu0 %v696, 64
    %v699 = vpop.permute.xlu0 %698
    %v701 = vmul.f32 %v683, %v699
    %703 = vrot.lane.b32.xlu0 %v701, 32
    %v704 = vpop.permute.xlu0 %703
    %s706 = scalar_lea.vmem [#allocation3], 32
    %707 = vst.msk [vmem:[%s706] sm:$0xff] %vm184, %v704
    %s708 = scalar_lea.vmem [#allocation2], 40
    %v709 = vld [vmem:[%s708] sm:$0xff]
    %v710 = vsel %vm184, %v704, 0
    %712 = vmatprep.subr.mxu0 0.0
    %713 = vmatpush1.msra.mxu0 %v179
    %714 = vmatprep.subr.mxu0 0.0
    %715 = vmatpush1.msra.mxu0 %v180
    %716 = vmatprep.subr.mxu0 0.0
    %717 = vmatpush1.msra.mxu0 %v181
    %718 = vmatprep.subr.mxu0 0.0
    %719 = vmatpush1.msra.mxu0 %v182
    %720 = vmatprep.subr.mxu0 0.0
    %721 = vmatpush1.msra.mxu0 0.0
    %722 = vmatprep.subr.mxu0 0.0
    %723 = vmatpush1.msra.mxu0 0.0
    %724 = vmatprep.subr.mxu0 0.0
    %725 = vmatpush1.msra.mxu0 0.0
    %726 = vmatprep.subr.mxu0 0.0
    %727 = vmatpush1.msra.mxu0 0.0
    %728 = vmatprep.subr.mxu0 0.0
    %729 = vmatpush1.msra.mxu0 0.0
    %730 = vmatprep.subr.mxu0 0.0
    %731 = vmatpush1.msra.mxu0 0.0
    %732 = vmatprep.subr.mxu0 0.0
    %733 = vmatpush1.msra.mxu0 0.0
    %734 = vmatprep.subr.mxu0 0.0
    %735 = vmatpush1.msra.mxu0 0.0
    %736 = vmatprep.subr.mxu0 0.0
    %737 = vmatpush1.msra.mxu0 0.0
    %738 = vmatprep.subr.mxu0 0.0
    %739 = vmatpush1.msra.mxu0 0.0
    %740 = vmatprep.subr.mxu0 0.0
    %741 = vmatpush1.msra.mxu0 0.0
    %742 = vmatprep.subr.mxu0 0.0
    %743 = vmatpush1.msra.mxu0 0.0
    %744 = vmatprep.subr.mxu0 0.0
    %745 = vmatpush1.msra.mxu0 0.0
    %746 = vmatprep.subr.mxu0 0.0
    %747 = vmatpush1.msra.mxu0 0.0
    %748 = vmatprep.subr.mxu0 0.0
    %749 = vmatpush1.msra.mxu0 0.0
    %750 = vmatprep.subr.mxu0 0.0
    %751 = vmatpush1.msra.mxu0 0.0
    %752 = vmatprep.subr.mxu0 0.0
    %753 = vmatpush1.msra.mxu0 0.0
    %754 = vmatprep.subr.mxu0 0.0
    %755 = vmatpush1.msra.mxu0 0.0
    %756 = vmatprep.subr.mxu0 0.0
    %757 = vmatpush1.msra.mxu0 0.0
    %758 = vmatprep.subr.mxu0 0.0
    %759 = vmatpush1.msra.mxu0 0.0
    %760 = vmatprep.subr.mxu0 0.0
    %761 = vmatpush1.msra.mxu0 0.0
    %762 = vmatprep.subr.mxu0 0.0
    %763 = vmatpush1.msra.mxu0 0.0
    %764 = vmatprep.subr.mxu0 0.0
    %765 = vmatpush1.msra.mxu0 0.0
    %766 = vmatprep.subr.mxu0 0.0
    %767 = vmatpush1.msra.mxu0 0.0
    %768 = vmatprep.subr.mxu0 0.0
    %769 = vmatpush1.msra.mxu0 0.0
    %770 = vmatprep.subr.mxu0 0.0
    %771 = vmatpush1.msra.mxu0 0.0
    %772 = vmatprep.subr.mxu0 0.0
    %773 = vmatpush1.msra.mxu0 0.0
    %774 = vmatprep.subr.mxu0 0.0
    %775 = vmatpush1.msra.mxu0 0.0
    %776 = vmatprep.mubr.f32.mxu0 0.0
    %777 = vmatmul.mubr.f32.gmra.mrb[0].mxu0 %v710
    %v778 = vpop.f32.mrb[0].mxu0
    %v779 = vadd.f32 0.0, %v778
    %v780 = vpop.f32.mrb[0].mxu0
    %781 = vdwg.mxu0
    %v782 = vadd.f32 %v709, %v779
    %v783 = vxor.u32 %v782, 2147483648
    %v784 = vmul.f32 %v783, 1.442695
    %v785 = vpow.pop %v784
    %v786 = vadd.f32 %v785, 1.0
    %v787 = vrcp.pop %v786
    %v788 = vmul.f32 1.0, %v787
    %v789 = vtanh.pop %v782
    %v790 = vmul.f32 %v788, %v695
    %792 = vrot.lane.b32.xlu0 %v789, 64
    %v793 = vpop.permute.xlu0 %792
    %v795 = vmul.f32 %v788, %v793
    %797 = vrot.lane.b32.xlu0 %v795, 32
    %v798 = vpop.permute.xlu0 %797
    %v800 = vadd.f32 %v790, %v798
    %v801 = vtanh.pop %v800
    %803 = vrot.lane.b32.xlu0 %v801, 64
    %v804 = vpop.permute.xlu0 %803
    %v806 = vmul.f32 %v788, %v804
    %808 = vrot.lane.b32.xlu0 %v806, 32
    %v809 = vpop.permute.xlu0 %808
    %s811 = scalar_lea.vmem [#allocation3], 40
    %812 = vst.msk [vmem:[%s811] sm:$0xff] %vm184, %v809
    %s813 = scalar_lea.vmem [#allocation2], 48
    %v814 = vld [vmem:[%s813] sm:$0xff]
    %v815 = vsel %vm184, %v809, 0
    %817 = vmatprep.subr.mxu0 0.0
    %818 = vmatpush1.msra.mxu0 %v179
    %819 = vmatprep.subr.mxu0 0.0
    %820 = vmatpush1.msra.mxu0 %v180
    %821 = vmatprep.subr.mxu0 0.0
    %822 = vmatpush1.msra.mxu0 %v181
    %823 = vmatprep.subr.mxu0 0.0
    %824 = vmatpush1.msra.mxu0 %v182
    %825 = vmatprep.subr.mxu0 0.0
    %826 = vmatpush1.msra.mxu0 0.0
    %827 = vmatprep.subr.mxu0 0.0
    %828 = vmatpush1.msra.mxu0 0.0
    %829 = vmatprep.subr.mxu0 0.0
    %830 = vmatpush1.msra.mxu0 0.0
    %831 = vmatprep.subr.mxu0 0.0
    %832 = vmatpush1.msra.mxu0 0.0
    %833 = vmatprep.subr.mxu0 0.0
    %834 = vmatpush1.msra.mxu0 0.0
    %835 = vmatprep.subr.mxu0 0.0
    %836 = vmatpush1.msra.mxu0 0.0
    %837 = vmatprep.subr.mxu0 0.0
    %838 = vmatpush1.msra.mxu0 0.0
    %839 = vmatprep.subr.mxu0 0.0
    %840 = vmatpush1.msra.mxu0 0.0
    %841 = vmatprep.subr.mxu0 0.0
    %842 = vmatpush1.msra.mxu0 0.0
    %843 = vmatprep.subr.mxu0 0.0
    %844 = vmatpush1.msra.mxu0 0.0
    %845 = vmatprep.subr.mxu0 0.0
    %846 = vmatpush1.msra.mxu0 0.0
    %847 = vmatprep.subr.mxu0 0.0
    %848 = vmatpush1.msra.mxu0 0.0
    %849 = vmatprep.subr.mxu0 0.0
    %850 = vmatpush1.msra.mxu0 0.0
    %851 = vmatprep.subr.mxu0 0.0
    %852 = vmatpush1.msra.mxu0 0.0
    %853 = vmatprep.subr.mxu0 0.0
    %854 = vmatpush1.msra.mxu0 0.0
    %855 = vmatprep.subr.mxu0 0.0
    %856 = vmatpush1.msra.mxu0 0.0
    %857 = vmatprep.subr.mxu0 0.0
    %858 = vmatpush1.msra.mxu0 0.0
    %859 = vmatprep.subr.mxu0 0.0
    %860 = vmatpush1.msra.mxu0 0.0
    %861 = vmatprep.subr.mxu0 0.0
    %862 = vmatpush1.msra.mxu0 0.0
    %863 = vmatprep.subr.mxu0 0.0
    %864 = vmatpush1.msra.mxu0 0.0
    %865 = vmatprep.subr.mxu0 0.0
    %866 = vmatpush1.msra.mxu0 0.0
    %867 = vmatprep.subr.mxu0 0.0
    %868 = vmatpush1.msra.mxu0 0.0
    %869 = vmatprep.subr.mxu0 0.0
    %870 = vmatpush1.msra.mxu0 0.0
    %871 = vmatprep.subr.mxu0 0.0
    %872 = vmatpush1.msra.mxu0 0.0
    %873 = vmatprep.subr.mxu0 0.0
    %874 = vmatpush1.msra.mxu0 0.0
    %875 = vmatprep.subr.mxu0 0.0
    %876 = vmatpush1.msra.mxu0 0.0
    %877 = vmatprep.subr.mxu0 0.0
    %878 = vmatpush1.msra.mxu0 0.0
    %879 = vmatprep.subr.mxu0 0.0
    %880 = vmatpush1.msra.mxu0 0.0
    %881 = vmatprep.mubr.f32.mxu0 0.0
    %882 = vmatmul.mubr.f32.gmra.mrb[0].mxu0 %v815
    %v883 = vpop.f32.mrb[0].mxu0
    %v884 = vadd.f32 0.0, %v883
    %v885 = vpop.f32.mrb[0].mxu0
    %886 = vdwg.mxu0
    %v887 = vadd.f32 %v814, %v884
    %v888 = vxor.u32 %v887, 2147483648
    %v889 = vmul.f32 %v888, 1.442695
    %v890 = vpow.pop %v889
    %v891 = vadd.f32 %v890, 1.0
    %v892 = vrcp.pop %v891
    %v893 = vmul.f32 1.0, %v892
    %v894 = vtanh.pop %v887
    %v895 = vmul.f32 %v893, %v800
    %897 = vrot.lane.b32.xlu0 %v894, 64
    %v898 = vpop.permute.xlu0 %897
    %v900 = vmul.f32 %v893, %v898
    %902 = vrot.lane.b32.xlu0 %v900, 32
    %v903 = vpop.permute.xlu0 %902
    %v905 = vadd.f32 %v895, %v903
    %v906 = vtanh.pop %v905
    %908 = vrot.lane.b32.xlu0 %v906, 64
    %v909 = vpop.permute.xlu0 %908
    %v911 = vmul.f32 %v893, %v909
    %913 = vrot.lane.b32.xlu0 %v911, 32
    %v914 = vpop.permute.xlu0 %913
    %s916 = scalar_lea.vmem [#allocation3], 48
    %917 = vst.msk [vmem:[%s916] sm:$0xff] %vm184, %v914
    %s918 = scalar_lea.vmem [#allocation2], 56
    %v919 = vld [vmem:[%s918] sm:$0xff]
    %v920 = vsel %vm184, %v914, 0
    %922 = vmatprep.subr.mxu0 0.0
    %923 = vmatpush1.msra.mxu0 %v179
    %924 = vmatprep.subr.mxu0 0.0
    %925 = vmatpush1.msra.mxu0 %v180
    %926 = vmatprep.subr.mxu0 0.0
    %927 = vmatpush1.msra.mxu0 %v181
    %928 = vmatprep.subr.mxu0 0.0
    %929 = vmatpush1.msra.mxu0 %v182
    %930 = vmatprep.subr.mxu0 0.0
    %931 = vmatpush1.msra.mxu0 0.0
    %932 = vmatprep.subr.mxu0 0.0
    %933 = vmatpush1.msra.mxu0 0.0
    %934 = vmatprep.subr.mxu0 0.0
    %935 = vmatpush1.msra.mxu0 0.0
    %936 = vmatprep.subr.mxu0 0.0
    %937 = vmatpush1.msra.mxu0 0.0
    %938 = vmatprep.subr.mxu0 0.0
    %939 = vmatpush1.msra.mxu0 0.0
    %940 = vmatprep.subr.mxu0 0.0
    %941 = vmatpush1.msra.mxu0 0.0
    %942 = vmatprep.subr.mxu0 0.0
    %943 = vmatpush1.msra.mxu0 0.0
    %944 = vmatprep.subr.mxu0 0.0
    %945 = vmatpush1.msra.mxu0 0.0
    %946 = vmatprep.subr.mxu0 0.0
    %947 = vmatpush1.msra.mxu0 0.0
    %948 = vmatprep.subr.mxu0 0.0
    %949 = vmatpush1.msra.mxu0 0.0
    %950 = vmatprep.subr.mxu0 0.0
    %951 = vmatpush1.msra.mxu0 0.0
    %952 = vmatprep.subr.mxu0 0.0
    %953 = vmatpush1.msra.mxu0 0.0
    %954 = vmatprep.subr.mxu0 0.0
    %955 = vmatpush1.msra.mxu0 0.0
    %956 = vmatprep.subr.mxu0 0.0
    %957 = vmatpush1.msra.mxu0 0.0
    %958 = vmatprep.subr.mxu0 0.0
    %959 = vmatpush1.msra.mxu0 0.0
    %960 = vmatprep.subr.mxu0 0.0
    %961 = vmatpush1.msra.mxu0 0.0
    %962 = vmatprep.subr.mxu0 0.0
    %963 = vmatpush1.msra.mxu0 0.0
    %964 = vmatprep.subr.mxu0 0.0
    %965 = vmatpush1.msra.mxu0 0.0
    %966 = vmatprep.subr.mxu0 0.0
    %967 = vmatpush1.msra.mxu0 0.0
    %968 = vmatprep.subr.mxu0 0.0
    %969 = vmatpush1.msra.mxu0 0.0
    %970 = vmatprep.subr.mxu0 0.0
    %971 = vmatpush1.msra.mxu0 0.0
    %972 = vmatprep.subr.mxu0 0.0
    %973 = vmatpush1.msra.mxu0 0.0
    %974 = vmatprep.subr.mxu0 0.0
    %975 = vmatpush1.msra.mxu0 0.0
    %976 = vmatprep.subr.mxu0 0.0
    %977 = vmatpush1.msra.mxu0 0.0
    %978 = vmatprep.subr.mxu0 0.0
    %979 = vmatpush1.msra.mxu0 0.0
    %980 = vmatprep.subr.mxu0 0.0
    %981 = vmatpush1.msra.mxu0 0.0
    %982 = vmatprep.subr.mxu0 0.0
    %983 = vmatpush1.msra.mxu0 0.0
    %984 = vmatprep.subr.mxu0 0.0
    %985 = vmatpush1.msra.mxu0 0.0
    %986 = vmatprep.mubr.f32.mxu0 0.0
    %987 = vmatmul.mubr.f32.gmra.mrb[0].mxu0 %v920
    %v988 = vpop.f32.mrb[0].mxu0
    %v989 = vadd.f32 0.0, %v988
    %v990 = vpop.f32.mrb[0].mxu0
    %991 = vdwg.mxu0
    %v992 = vadd.f32 %v919, %v989
    %v993 = vxor.u32 %v992, 2147483648
    %v994 = vmul.f32 %v993, 1.442695
    %v995 = vpow.pop %v994
    %v996 = vadd.f32 %v995, 1.0
    %v997 = vrcp.pop %v996
    %v998 = vmul.f32 1.0, %v997
    %v999 = vtanh.pop %v992
    %v1000 = vmul.f32 %v998, %v905
    %1002 = vrot.lane.b32.xlu0 %v999, 64
    %v1003 = vpop.permute.xlu0 %1002
    %v1005 = vmul.f32 %v998, %v1003
    %1007 = vrot.lane.b32.xlu0 %v1005, 32
    %v1008 = vpop.permute.xlu0 %1007
    %v1010 = vadd.f32 %v1000, %v1008
    %v1011 = vtanh.pop %v1010
    %1013 = vrot.lane.b32.xlu0 %v1011, 64
    %v1014 = vpop.permute.xlu0 %1013
    %v1016 = vmul.f32 %v998, %v1014
    %1018 = vrot.lane.b32.xlu0 %v1016, 32
    %v1019 = vpop.permute.xlu0 %1018
    %s1021 = scalar_lea.vmem [#allocation3], 56
    %1022 = vst.msk [vmem:[%s1021] sm:$0xff] %vm184, %v1019
    %v1023 = vld [vmem:[#allocation3] sm:$0xff]
    %v1024 = vld [vmem:[#allocation3 + $0x8] sm:$0xff]
    %v1025 = vld [vmem:[#allocation3 + $0x10] sm:$0xff]
    %v1026 = vld [vmem:[#allocation3 + $0x18] sm:$0xff]
    %v1027 = vld [vmem:[#allocation3 + $0x20] sm:$0xff]
    %v1028 = vld [vmem:[#allocation3 + $0x28] sm:$0xff]
    %v1029 = vld [vmem:[#allocation3 + $0x30] sm:$0xff]
    %v1030 = vld [vmem:[#allocation3 + $0x38] sm:$0xff]
    %v1031 = vld [vmem:[%s4] sm:$0xff]
    %v1032 = vld [vmem:[%s4 + $0x8] sm:$0xff]
    %v1033 = vld [vmem:[%s4 + $0x10] sm:$0xff]
    %v1034 = vld [vmem:[%s4 + $0x18] sm:$0xff]
    %v1035 = vld [vmem:[%s5] sm:$0x1]
    %v1037 = vlaneseq
    %v1038 = vshrl.u32 %v1037, 7
    %v1039 = vsub.s32 0, %v1038
    %v1040 = vrot.slane %v1035, %v1039
    %v1043 = vsel %vm184, %v1023, 0
    %v1046 = vsel %vm184, %v1024, 0
    %v1049 = vsel %vm184, %v1025, 0
    %v1052 = vsel %vm184, %v1026, 0
    %v1055 = vsel %vm184, %v1027, 0
    %v1058 = vsel %vm184, %v1028, 0
    %v1061 = vsel %vm184, %v1029, 0
    %v1064 = vsel %vm184, %v1030, 0
    %1066 = vmatprep.subr.mxu0 0.0
    %1067 = vmatpush1.msra.mxu0 %v1031
    %1068 = vmatprep.subr.mxu0 0.0
    %1069 = vmatpush1.msra.mxu0 %v1032
    %1070 = vmatprep.subr.mxu0 0.0
    %1071 = vmatpush1.msra.mxu0 %v1033
    %1072 = vmatprep.subr.mxu0 0.0
    %1073 = vmatpush1.msra.mxu0 %v1034
    %1074 = vmatprep.subr.mxu0 0.0
    %1075 = vmatpush1.msra.mxu0 0.0
    %1076 = vmatprep.subr.mxu0 0.0
    %1077 = vmatpush1.msra.mxu0 0.0
    %1078 = vmatprep.subr.mxu0 0.0
    %1079 = vmatpush1.msra.mxu0 0.0
    %1080 = vmatprep.subr.mxu0 0.0
    %1081 = vmatpush1.msra.mxu0 0.0
    %1082 = vmatprep.subr.mxu0 0.0
    %1083 = vmatpush1.msra.mxu0 0.0
    %1084 = vmatprep.subr.mxu0 0.0
    %1085 = vmatpush1.msra.mxu0 0.0
    %1086 = vmatprep.subr.mxu0 0.0
    %1087 = vmatpush1.msra.mxu0 0.0
    %1088 = vmatprep.subr.mxu0 0.0
    %1089 = vmatpush1.msra.mxu0 0.0
    %1090 = vmatprep.subr.mxu0 0.0
    %1091 = vmatpush1.msra.mxu0 0.0
    %1092 = vmatprep.subr.mxu0 0.0
    %1093 = vmatpush1.msra.mxu0 0.0
    %1094 = vmatprep.subr.mxu0 0.0
    %1095 = vmatpush1.msra.mxu0 0.0
    %1096 = vmatprep.subr.mxu0 0.0
    %1097 = vmatpush1.msra.mxu0 0.0
    %1098 = vmatprep.subr.mxu0 0.0
    %1099 = vmatpush1.msra.mxu0 0.0
    %1100 = vmatprep.subr.mxu0 0.0
    %1101 = vmatpush1.msra.mxu0 0.0
    %1102 = vmatprep.subr.mxu0 0.0
    %1103 = vmatpush1.msra.mxu0 0.0
    %1104 = vmatprep.subr.mxu0 0.0
    %1105 = vmatpush1.msra.mxu0 0.0
    %1106 = vmatprep.subr.mxu0 0.0
    %1107 = vmatpush1.msra.mxu0 0.0
    %1108 = vmatprep.subr.mxu0 0.0
    %1109 = vmatpush1.msra.mxu0 0.0
    %1110 = vmatprep.subr.mxu0 0.0
    %1111 = vmatpush1.msra.mxu0 0.0
    %1112 = vmatprep.subr.mxu0 0.0
    %1113 = vmatpush1.msra.mxu0 0.0
    %1114 = vmatprep.subr.mxu0 0.0
    %1115 = vmatpush1.msra.mxu0 0.0
    %1116 = vmatprep.subr.mxu0 0.0
    %1117 = vmatpush1.msra.mxu0 0.0
    %1118 = vmatprep.subr.mxu0 0.0
    %1119 = vmatpush1.msra.mxu0 0.0
    %1120 = vmatprep.subr.mxu0 0.0
    %1121 = vmatpush1.msra.mxu0 0.0
    %1122 = vmatprep.subr.mxu0 0.0
    %1123 = vmatpush1.msra.mxu0 0.0
    %1124 = vmatprep.subr.mxu0 0.0
    %1125 = vmatpush1.msra.mxu0 0.0
    %1126 = vmatprep.subr.mxu0 0.0
    %1127 = vmatpush1.msra.mxu0 0.0
    %1128 = vmatprep.subr.mxu0 0.0
    %1129 = vmatpush1.msra.mxu0 0.0
    %1130 = vmatprep.mubr.f32.mxu0 0.0
    %1131 = vmatmul.mubr.f32.gmra.mrb[0].mxu0 %v1043
    %v1132 = vpop.f32.mrb[0].mxu0
    %v1133 = vadd.f32 %v1040, %v1132
    %v1134 = vpop.f32.mrb[0].mxu0
    %1135 = vmatprep.mubr.f32.mxu0 0.0
    %1136 = vmatmul.mubr.f32.gmra.mrb[0].mxu0 %v1046
    %v1137 = vpop.f32.mrb[0].mxu0
    %v1138 = vadd.f32 %v1040, %v1137
    %v1139 = vpop.f32.mrb[0].mxu0
    %1140 = vmatprep.mubr.f32.mxu0 0.0
    %1141 = vmatmul.mubr.f32.gmra.mrb[0].mxu0 %v1049
    %v1142 = vpop.f32.mrb[0].mxu0
    %v1143 = vadd.f32 %v1040, %v1142
    %v1144 = vpop.f32.mrb[0].mxu0
    %1145 = vmatprep.mubr.f32.mxu0 0.0
    %1146 = vmatmul.mubr.f32.gmra.mrb[0].mxu0 %v1052
    %v1147 = vpop.f32.mrb[0].mxu0
    %v1148 = vadd.f32 %v1040, %v1147
    %v1149 = vpop.f32.mrb[0].mxu0
    %1150 = vmatprep.mubr.f32.mxu0 0.0
    %1151 = vmatmul.mubr.f32.gmra.mrb[0].mxu0 %v1055
    %v1152 = vpop.f32.mrb[0].mxu0
    %v1153 = vadd.f32 %v1040, %v1152
    %v1154 = vpop.f32.mrb[0].mxu0
    %1155 = vmatprep.mubr.f32.mxu0 0.0
    %1156 = vmatmul.mubr.f32.gmra.mrb[0].mxu0 %v1058
    %v1157 = vpop.f32.mrb[0].mxu0
    %v1158 = vadd.f32 %v1040, %v1157
    %v1159 = vpop.f32.mrb[0].mxu0
    %1160 = vmatprep.mubr.f32.mxu0 0.0
    %1161 = vmatmul.mubr.f32.gmra.mrb[0].mxu0 %v1061
    %v1162 = vpop.f32.mrb[0].mxu0
    %v1163 = vadd.f32 %v1040, %v1162
    %v1164 = vpop.f32.mrb[0].mxu0
    %1165 = vmatprep.mubr.f32.mxu0 0.0
    %1166 = vmatmul.mubr.f32.gmra.mrb[0].mxu0 %v1064
    %v1167 = vpop.f32.mrb[0].mxu0
    %v1168 = vadd.f32 %v1040, %v1167
    %v1169 = vpop.f32.mrb[0].mxu0
    %1170 = vdwg.mxu0
    %v1171 = vmax.f32 %v1133, 0.0
    %v1172 = vmax.f32 %v1138, 0.0
    %v1173 = vmax.f32 %v1143, 0.0
    %v1174 = vmax.f32 %v1148, 0.0
    %v1175 = vmax.f32 %v1153, 0.0
    %v1176 = vmax.f32 %v1158, 0.0
    %v1177 = vmax.f32 %v1163, 0.0
    %v1178 = vmax.f32 %v1168, 0.0
    %1179 = vst [vmem:[#allocation4] sm:$0xff] %v1171
    %1180 = vst [vmem:[#allocation4 + $0x8] sm:$0xff] %v1172
    %1181 = vst [vmem:[#allocation4 + $0x10] sm:$0xff] %v1173
    %1182 = vst [vmem:[#allocation4 + $0x18] sm:$0xff] %v1174
    %1183 = vst [vmem:[#allocation4 + $0x20] sm:$0xff] %v1175
    %1184 = vst [vmem:[#allocation4 + $0x28] sm:$0xff] %v1176
    %1185 = vst [vmem:[#allocation4 + $0x30] sm:$0xff] %v1177
    %1186 = vst [vmem:[#allocation4 + $0x38] sm:$0xff] %v1178
    // Predicated region
    $region26: #{tpu_custom_call.1} parent=1 // pred_check
      _
    $region27: #{tpu_custom_call.1} parent=1 // pred_check_branch
      %1188 = sbr.rel (0) target = $region29
    $region28: #{tpu_custom_call.1} parent=1 // pred_region
      %s1190 = ssub.s32 1024, 1024
      %1191 = vsyncadd [#allocation5], %s1190
      %s1192 = sshll.u32 [#allocation4], 4
      %s1193 = int_to_ptr.vmem [resolvable:$true] %s1192
      %1198 = dma.vmem_to_hbm [thread:$0]  %s1193, 1024, %s6, [#allocation5], 128, 128, 8
    $region29: #{tpu_custom_call.1} parent=1 // pred_fallthru
      _
    // Predicated region
    $region30: #{tpu_custom_call.1} parent=1 // pred_check
      _
    $region31: #{tpu_custom_call.1} parent=1 // pred_check_branch
      %1200 = sbr.rel (0) target = $region33
    $region32: #{tpu_custom_call.1} parent=1 // pred_region
      %1201 = dma.done [#allocation5], 1024
    $region33: #{tpu_custom_call.1} parent=1 // pred_fallthru
      _
    %1202 = vsyncpa [#allocation5], 1

</llo_original>
